<compile_context>
chip_gen: v7x
topology: tpu7x:2x2x1
jax: 0.10.0
libtpu: 0.0.40
codegen_flags: <defaults>
</compile_context>

<pallas_src>
import math

import jax
import jax.numpy as jnp
from jax import lax
from jax.experimental import pallas as pl
from jax.experimental.pallas import tpu as pltpu


def _affine_flow_kernel(out_ref, x_ref, scaling_ref, ldj_ref, x_out_ref, ldj_out_ref):
    """One (TBF, KN) lane-folded batch tile (k original rows packed per folded row)."""
    kn = x_ref.shape[1]            # k * num_vars  (folded lane width)
    two_kn = out_ref.shape[1]      # 2 * k * num_vars
    n_seg = ldj_ref.shape[1]       # k   (original batch rows packed per folded row)
    n_vars = kn // n_seg           # num_vars

    out_blk = out_ref[...].astype(jnp.float32)     # interleaved [t0, s0, t1, s1, ...]

    # --- De-interleave t / s on the (otherwise idle) MXU with 0/1 selection matrices.
    #     Exact at HIGHEST precision: each output element is one 1.0*x plus zeros.
    #     (A single fused (2KN, 2KN) selection matmul costs the same MXU flops as these
    #     two (2KN, KN) ones, so keep them separate and simple.)
    r = lax.broadcasted_iota(jnp.int32, (two_kn, kn), 0)
    c = lax.broadcasted_iota(jnp.int32, (two_kn, kn), 1)
    sel_t = jnp.where(r == 2 * c, 1.0, 0.0)        # even lanes -> t (torch unbind order)
    sel_s = jnp.where(r == 2 * c + 1, 1.0, 0.0)    # odd  lanes -> s
    t = jnp.dot(out_blk, sel_t, preferred_element_type=jnp.float32,
                precision=lax.Precision.HIGHEST)
    s_raw = jnp.dot(out_blk, sel_s, preferred_element_type=jnp.float32,
                    precision=lax.Precision.HIGHEST)

    # --- Scaling path hoisted to the (1, KN) parameter row: one exp/tanh/reciprocal per
    #     tile; the per-element divide is replaced by a multiply with the reciprocal.
    sc = jnp.tanh(jnp.exp(scaling_ref[...].astype(jnp.float32)) / 3.0) * 3.0
    inv_sc = pl.reciprocal(jnp.maximum(sc, 1.0), approx=False)
    s = jnp.tanh(s_raw * inv_sc) * sc

    x_out_ref[...] = ((x_ref[...].astype(jnp.float32) + t) * jnp.exp(s)
                      ).astype(x_out_ref.dtype)

    # --- ldj: segmented lane reduction (sum each num_vars-wide segment -> one value per
    #     ORIGINAL batch row), again as a 0/1 matmul on the MXU.
    rr = lax.broadcasted_iota(jnp.int32, (kn, n_seg), 0)
    cc = lax.broadcasted_iota(jnp.int32, (kn, n_seg), 1)
    seg = jnp.where((rr >= cc * n_vars) & (rr < (cc + 1) * n_vars), 1.0, 0.0)
    s_sum = jnp.dot(s, seg, preferred_element_type=jnp.float32,
                    precision=lax.Precision.HIGHEST)              # (TBF, k)
    ldj_out_ref[...] = (ldj_ref[...].astype(jnp.float32) - s_sum
                        ).astype(ldj_out_ref.dtype)


def _fold_factor(batch, num_vars):
    """How many batch rows to pack per folded row (free row-major reshapes only).

    Prefer the smallest k with (k * num_vars) % 128 == 0 (lane-dense, unmasked stores);
    otherwise fall back to the largest divisor of `batch` below that, which is still
    correct, just with a partially masked lane tail."""
    if batch <= 0:
        return 1
    k = math.lcm(num_vars, 128) // num_vars
    if batch % k == 0:
        return k
    for cand in range(min(k, batch), 0, -1):
        if batch % cand == 0:
            return cand
    return 1


def _pick_batch_tile(folded_batch, folded_lanes, k):
    """Largest folded-batch tile whose double-buffered I/O blocks fit ~8 MiB.
    Conservative for v7x (64 MiB VMEM total); v5e/v6e have 128 MiB."""
    io_budget = 8 * 1024 * 1024
    per_row = (4 * folded_lanes + 2 * k) * 4 * 2   # out + x + x_out (+ ldj), f32, 2x buffered
    tile = min(2048, max(8, io_budget // per_row))
    tile -= tile % 8
    tile = max(tile, 8)
    return folded_batch if folded_batch <= tile else tile


def affine_flow_forward(x, out, ldj, scaling, *, batch_tile=None):
    """x: (B, N), out: (B, 2N) interleaved (t, s), ldj: (B,), scaling: (N,)."""
    B, N = x.shape
    assert out.shape == (B, 2 * N) and ldj.shape == (B,) and scaling.shape == (N,)

    # Lane-dense folding: pure metadata reshapes (row-major), no HBM data movement.
    k = _fold_factor(B, N)
    Bf, KN = B // k, k * N
    out_f = out.reshape(Bf, 2 * KN)
    x_f = x.reshape(Bf, KN)
    ldj_f = ldj.reshape(Bf, k)
    scaling_f = jnp.tile(scaling.reshape(1, N), (1, k))          # (1, KN), tiny

    TBF = _pick_batch_tile(Bf, KN, k) if batch_tile is None else batch_tile
    grid = (pl.cdiv(Bf, TBF),)

    cost = pl.CostEstimate(
        flops=int(2 * 2 * Bf * (2 * KN) * KN      # two de-interleave selection matmuls
                  + 2 * Bf * KN * k               # segmented ldj-sum matmul
                  + 6 * B * N),                   # elementwise affine math
        transcendentals=int(2 * B * N + 2 * KN),  # tanh + exp per element (+ scaling row)
        bytes_accessed=int(4 * (4 * B * N + 2 * B + 2 * KN)),
    )

    x_new_f, ldj_new_f = pl.pallas_call(
        _affine_flow_kernel,
        grid=grid,
        in_specs=[
            pl.BlockSpec((TBF, 2 * KN), lambda i: (i, 0)),   # out (interleaved t/s)
            pl.BlockSpec((TBF, KN), lambda i: (i, 0)),       # x
            pl.BlockSpec((1, KN), lambda i: (0, 0)),         # scaling (stays resident)
            pl.BlockSpec((TBF, k), lambda i: (i, 0)),        # ldj
        ],
        out_specs=(
            pl.BlockSpec((TBF, KN), lambda i: (i, 0)),       # x_out
            pl.BlockSpec((TBF, k), lambda i: (i, 0)),        # ldj_out
        ),
        out_shape=(
            jax.ShapeDtypeStruct((Bf, KN), x.dtype),
            jax.ShapeDtypeStruct((Bf, k), ldj.dtype),
        ),
        compiler_params=pltpu.CompilerParams(
            dimension_semantics=("parallel",),               # v7x: shard batch over both TCs
            vmem_limit_bytes=32 * 1024 * 1024,               # > v5e 16 MiB default, <= v7x/2
        ),
        cost_estimate=cost,
    )(out_f, x_f, scaling_f, ldj_f)

    return x_new_f.reshape(B, N), ldj_new_f.reshape(B)


def _reference_forward(x, out, ldj, scaling):
    B, N = x.shape
    out2 = out.reshape(B, N, 2)
    t, s = out2[..., 0], out2[..., 1]
    sc = jnp.tanh(jnp.exp(scaling)[None] / 3.0) * 3.0
    s = jnp.tanh(s / jnp.maximum(sc, 1.0)) * sc
    return (x + t) * jnp.exp(s), ldj - s.sum(axis=1)


if __name__ == "__main__":
    key = jax.random.PRNGKey(0)
    # (batch, num_vars): power-of-two folds plus one awkward case exercising the
    # lcm/divisor fold fallback.
    for (batch, num_vars) in [(256, 4), (64, 8), (16, 16), (48, 12)]:
        key, kx, kout, kldj, kscale = jax.random.split(key, 5)
        x = jax.random.normal(kx, (batch, num_vars), dtype=jnp.float32)
        out = jax.random.normal(kout, (batch, 2 * num_vars), dtype=jnp.float32)
        ldj = jax.random.normal(kldj, (batch,), dtype=jnp.float32)
        # nn.Parameter(torch.zeros(num_vars)); perturbed so the scaling path is exercised.
        scaling = 0.1 * jax.random.normal(kscale, (num_vars,), dtype=jnp.float32)

        x_new, ldj_new = affine_flow_forward(x, out, ldj, scaling)
        jax.block_until_ready((x_new, ldj_new))

        x_ref, ldj_ref = _reference_forward(x, out, ldj, scaling)
        assert jnp.allclose(x_new, x_ref, atol=1e-5, rtol=1e-5), (batch, num_vars)
        assert jnp.allclose(ldj_new, ldj_ref, atol=1e-5, rtol=1e-5), (batch, num_vars)

    print("KERNEL_OK")
</pallas_src>

<mosaic_0001>
module attributes {stable_mosaic.version = 11 : i64} {
  func.func @_affine_flow_kernel(%arg0: i32, %arg1: memref<8x256xf32, #tpu.memory_space<vmem>>, %arg2: memref<8x128xf32, #tpu.memory_space<vmem>>, %arg3: memref<1x128xf32, #tpu.memory_space<vmem>>, %arg4: memref<8x32xf32, #tpu.memory_space<vmem>>, %arg5: memref<8x128xf32, #tpu.memory_space<vmem>>, %arg6: memref<8x32xf32, #tpu.memory_space<vmem>>) attributes {dimension_semantics = [#tpu.dimension_semantics<parallel>], iteration_bounds = array<i64: 1>, scalar_prefetch = 0 : i64, scratch_operands = 0 : i64, tpu.core_type = #tpu.core_type<tc>, window_params = [{transform_indices = @transform_0, window_bounds = array<i64: 8, 256>}, {transform_indices = @transform_1, window_bounds = array<i64: 8, 128>}, {pipeline_mode = #tpu.pipeline_mode<synchronous>, transform_indices = @transform_2, window_bounds = array<i64: 1, 128>}, {transform_indices = @transform_3, window_bounds = array<i64: 8, 32>}, {transform_indices = @transform_4, window_bounds = array<i64: 8, 128>}, {transform_indices = @transform_5, window_bounds = array<i64: 8, 32>}]} {
    %c0 = arith.constant 0 : index
    %c0_0 = arith.constant 0 : index
    %0 = vector.load %arg1[%c0, %c0_0] : memref<8x256xf32, #tpu.memory_space<vmem>>, vector<8x256xf32>
    %1 = tpu.iota {dimensions = array<i32: 0>} : vector<256x128xi32>
    %2 = tpu.iota {dimensions = array<i32: 1>} : vector<256x128xi32>
    %c2_i32 = arith.constant 2 : i32
    %3 = vector.broadcast %c2_i32 : i32 to vector<256x128xi32>
    %4 = arith.muli %3, %2 : vector<256x128xi32>
    %5 = arith.cmpi eq, %1, %4 : vector<256x128xi32>
    %cst = arith.constant 1.000000e+00 : f32
    %cst_1 = arith.constant 0.000000e+00 : f32
    %6 = vector.broadcast %cst : f32 to vector<256x128xf32>
    %7 = vector.broadcast %cst_1 : f32 to vector<256x128xf32>
    %8 = arith.select %5, %6, %7 : vector<256x128xi1>, vector<256x128xf32>
    %c2_i32_2 = arith.constant 2 : i32
    %9 = vector.broadcast %c2_i32_2 : i32 to vector<256x128xi32>
    %10 = arith.muli %9, %2 : vector<256x128xi32>
    %c1_i32 = arith.constant 1 : i32
    %11 = vector.broadcast %c1_i32 : i32 to vector<256x128xi32>
    %12 = arith.addi %10, %11 : vector<256x128xi32>
    %13 = arith.cmpi eq, %1, %12 : vector<256x128xi32>
    %cst_3 = arith.constant 1.000000e+00 : f32
    %cst_4 = arith.constant 0.000000e+00 : f32
    %14 = vector.broadcast %cst_3 : f32 to vector<256x128xf32>
    %15 = vector.broadcast %cst_4 : f32 to vector<256x128xf32>
    %16 = arith.select %13, %14, %15 : vector<256x128xi1>, vector<256x128xf32>
    %cst_5 = arith.constant dense<0.000000e+00> : vector<8x128xf32>
    %17 = tpu.matmul %0, %8, %cst_5 {dimension_numbers = #tpu.dot_dimension_numbers<[1], [0], [0], [1], [0, 0, 1, 1], [], []>, precision = #tpu.contract_precision<fp32>} : vector<8x256xf32>, vector<256x128xf32>, vector<8x128xf32> -> vector<8x128xf32>
    %cst_6 = arith.constant dense<0.000000e+00> : vector<8x128xf32>
    %18 = tpu.matmul %0, %16, %cst_6 {dimension_numbers = #tpu.dot_dimension_numbers<[1], [0], [0], [1], [0, 0, 1, 1], [], []>, precision = #tpu.contract_precision<fp32>} : vector<8x256xf32>, vector<256x128xf32>, vector<8x128xf32> -> vector<8x128xf32>
    %c0_7 = arith.constant 0 : index
    %c0_8 = arith.constant 0 : index
    %19 = vector.load %arg3[%c0_7, %c0_8] : memref<1x128xf32, #tpu.memory_space<vmem>>, vector<1x128xf32>
    %20 = math.exp %19 : vector<1x128xf32>
    %cst_9 = arith.constant 3.000000e+00 : f32
    %21 = vector.broadcast %cst_9 : f32 to vector<1x128xf32>
    %22 = arith.divf %20, %21 : vector<1x128xf32>
    %23 = math.tanh %22 : vector<1x128xf32>
    %cst_10 = arith.constant 3.000000e+00 : f32
    %24 = vector.broadcast %cst_10 : f32 to vector<1x128xf32>
    %25 = arith.mulf %23, %24 : vector<1x128xf32>
    %cst_11 = arith.constant 1.000000e+00 : f32
    %26 = vector.broadcast %cst_11 : f32 to vector<1x128xf32>
    %27 = arith.maximumf %25, %26 : vector<1x128xf32>
    %28 = tpu.reciprocal %27 : vector<1x128xf32> -> vector<1x128xf32>
    %29 = vector.broadcast %28 : vector<1x128xf32> to vector<8x128xf32>
    %30 = arith.mulf %18, %29 : vector<8x128xf32>
    %31 = math.tanh %30 : vector<8x128xf32>
    %32 = vector.broadcast %25 : vector<1x128xf32> to vector<8x128xf32>
    %33 = arith.mulf %31, %32 : vector<8x128xf32>
    %c0_12 = arith.constant 0 : index
    %c0_13 = arith.constant 0 : index
    %34 = vector.load %arg2[%c0_12, %c0_13] : memref<8x128xf32, #tpu.memory_space<vmem>>, vector<8x128xf32>
    %35 = arith.addf %34, %17 : vector<8x128xf32>
    %36 = math.exp %33 : vector<8x128xf32>
    %37 = arith.mulf %35, %36 : vector<8x128xf32>
    %c0_14 = arith.constant 0 : index
    %c0_15 = arith.constant 0 : index
    %38 = vector.load %arg5[%c0_14, %c0_15] : memref<8x128xf32, #tpu.memory_space<vmem>>, vector<8x128xf32>
    tpu.vector_store %arg5[%c0_14, %c0_15], %37 {strides = array<i32>} : memref<8x128xf32, #tpu.memory_space<vmem>>, vector<8x128xf32>,
    %39 = tpu.iota {dimensions = array<i32: 0>} : vector<128x32xi32>
    %40 = tpu.iota {dimensions = array<i32: 1>} : vector<128x32xi32>
    %c4_i32 = arith.constant 4 : i32
    %41 = vector.broadcast %c4_i32 : i32 to vector<128x32xi32>
    %42 = arith.muli %40, %41 : vector<128x32xi32>
    %43 = arith.cmpi sge, %39, %42 : vector<128x32xi32>
    %c1_i32_16 = arith.constant 1 : i32
    %44 = vector.broadcast %c1_i32_16 : i32 to vector<128x32xi32>
    %45 = arith.addi %40, %44 : vector<128x32xi32>
    %c4_i32_17 = arith.constant 4 : i32
    %46 = vector.broadcast %c4_i32_17 : i32 to vector<128x32xi32>
    %47 = arith.muli %45, %46 : vector<128x32xi32>
    %48 = arith.cmpi slt, %39, %47 : vector<128x32xi32>
    %49 = arith.andi %43, %48 : vector<128x32xi1>
    %cst_18 = arith.constant 1.000000e+00 : f32
    %cst_19 = arith.constant 0.000000e+00 : f32
    %50 = vector.broadcast %cst_18 : f32 to vector<128x32xf32>
    %51 = vector.broadcast %cst_19 : f32 to vector<128x32xf32>
    %52 = arith.select %49, %50, %51 : vector<128x32xi1>, vector<128x32xf32>
    %cst_20 = arith.constant dense<0.000000e+00> : vector<8x32xf32>
    %53 = tpu.matmul %33, %52, %cst_20 {dimension_numbers = #tpu.dot_dimension_numbers<[1], [0], [0], [1], [0, 0, 1, 1], [], []>, precision = #tpu.contract_precision<fp32>} : vector<8x128xf32>, vector<128x32xf32>, vector<8x32xf32> -> vector<8x32xf32>
    %c0_21 = arith.constant 0 : index
    %c0_22 = arith.constant 0 : index
    %54 = vector.load %arg4[%c0_21, %c0_22] : memref<8x32xf32, #tpu.memory_space<vmem>>, vector<8x32xf32>
    %55 = arith.subf %54, %53 : vector<8x32xf32>
    %c0_23 = arith.constant 0 : index
    %c0_24 = arith.constant 0 : index
    %56 = vector.load %arg6[%c0_23, %c0_24] : memref<8x32xf32, #tpu.memory_space<vmem>>, vector<8x32xf32>
    tpu.vector_store %arg6[%c0_23, %c0_24], %55 {strides = array<i32>} : memref<8x32xf32, #tpu.memory_space<vmem>>, vector<8x32xf32>,
    return
  }
  func.func @transform_0(%arg0: i32) -> (i32, i32) {
    %c0_i32 = arith.constant 0 : i32
    %c0_i32_0 = arith.constant 0 : i32
    return %arg0, %c0_i32 : i32, i32
  }
  func.func @transform_1(%arg0: i32) -> (i32, i32) {
    %c0_i32 = arith.constant 0 : i32
    %c0_i32_0 = arith.constant 0 : i32
    return %arg0, %c0_i32 : i32, i32
  }
  func.func @transform_2(%arg0: i32) -> (i32, i32) {
    %c0_i32 = arith.constant 0 : i32
    %c0_i32_0 = arith.constant 0 : i32
    %c0_i32_1 = arith.constant 0 : i32
    return %c0_i32, %c0_i32_0 : i32, i32
  }
  func.func @transform_3(%arg0: i32) -> (i32, i32) {
    %c0_i32 = arith.constant 0 : i32
    %c0_i32_0 = arith.constant 0 : i32
    return %arg0, %c0_i32 : i32, i32
  }
  func.func @transform_4(%arg0: i32) -> (i32, i32) {
    %c0_i32 = arith.constant 0 : i32
    %c0_i32_0 = arith.constant 0 : i32
    return %arg0, %c0_i32 : i32, i32
  }
  func.func @transform_5(%arg0: i32) -> (i32, i32) {
    %c0_i32 = arith.constant 0 : i32
    %c0_i32_0 = arith.constant 0 : i32
    return %arg0, %c0_i32 : i32, i32
  }
}

</mosaic_0001>

<llo_original>
// kernel: tpu_custom_call.1
$region0: #{tpu_custom_call.1}
  #allocation0 [shape = 'u32[]', space=smem, size = 0x4, offset = 0x4, fixed_abs, tag = 'smem constant byte address 0x4 - core index']
  #allocation1 [shape = 'u32[144,128]{1,0:T(1,128)}', space=vmem, size = 0x12000, scoped, tag = 'internal scratch']
  %s0 = inlined_call_operand.hbm [shape: f32[8,256], index: 0, kind: input, shape index: {}]
  %s1 = inlined_call_operand.hbm [shape: f32[8,128], index: 1, kind: input, shape index: {}]
  %s2 = inlined_call_operand.vmem [shape: f32[1,128], index: 2, kind: input, shape index: {}]
  %s3 = inlined_call_operand.vmem [shape: f32[8,32], index: 3, kind: input, shape index: {}]
  %s4 = inlined_call_operand.hbm [shape: f32[8,128], index: 4, kind: output, shape index: {0}]
  %s5 = inlined_call_operand.hbm [shape: f32[8,32], index: 5, kind: output, shape index: {1}]
  %6 = xla_tuple %s4, %s5
  %s7 = sld [smem:[#allocation0]]
  $region42: #{tpu_custom_call.1} parent=0
    _
  %s9 = ssub.s32 1, %s7
  %s10 = scalar_select 0, %s9, %s7
  $region1: #{tpu_custom_call.1} parent=0
    #allocation2 [shape = 'u8[8192]{0}', space=vmem, size = 0x2000, scoped, tag = 'input window, operand 0, single buffered']
    #allocation3 [shape = 's32[1]{0}', space=sflag, size = 0x4, scoped, tag = 'scoped memory for tpu_custom_call.1']
    #allocation4 [shape = 's32[1]{0}', space=sflag, size = 0x4, scoped, tag = 'scoped memory for tpu_custom_call.1']
    #allocation5 [shape = 'u8[4096]{0}', space=vmem, size = 0x1000, scoped, tag = 'input window, operand 1, single buffered']
    #allocation6 [shape = 's32[1]{0}', space=sflag, size = 0x4, scoped, tag = 'scoped memory for tpu_custom_call.1']
    #allocation7 [shape = 'u8[4096]{0}', space=vmem, size = 0x1000, scoped, tag = 'output window, operand 0, single buffered']
    #allocation8 [shape = 'u8[4096]{0}', space=vmem, size = 0x1000, scoped, tag = 'output window, operand 1, single buffered']
    #allocation9 [shape = 's32[1]{0}', space=sflag, size = 0x4, scoped, tag = 'scoped memory for tpu_custom_call.1']
    %11 = vsyncpa [#allocation3], 0
    %12 = vsyncpa [#allocation6], 0
    %13 = vsyncpa [#allocation4], 0
    %14 = vsyncpa [#allocation9], 0
    // Predicated region
    $region2: #{tpu_custom_call.1} parent=1 // pred_check
      _
    $region3: #{tpu_custom_call.1} parent=1 // pred_check_branch
      %16 = sbr.rel (0) target = $region5
    $region4: #{tpu_custom_call.1} parent=1 // pred_region
      %s18 = ssub.s32 256, 256
      %19 = vsyncadd [#allocation3], %s18
      %s21 = sshll.u32 [#allocation2], 4
      %s22 = int_to_ptr.vmem [resolvable:$true] %s21
      %24 = dma.hbm_to_vmem [thread:$0]  %s0, 256, %s22, [#allocation3]
    $region5: #{tpu_custom_call.1} parent=1 // pred_fallthru
      _
    // Predicated region
    $region6: #{tpu_custom_call.1} parent=1 // pred_check
      _
    $region7: #{tpu_custom_call.1} parent=1 // pred_check_branch
      %26 = sbr.rel (0) target = $region9
    $region8: #{tpu_custom_call.1} parent=1 // pred_region
      %s28 = ssub.s32 128, 128
      %29 = vsyncadd [#allocation6], %s28
      %s31 = sshll.u32 [#allocation5], 4
      %s32 = int_to_ptr.vmem [resolvable:$true] %s31
      %34 = dma.hbm_to_vmem [thread:$0]  %s1, 128, %s32, [#allocation6]
    $region9: #{tpu_custom_call.1} parent=1 // pred_fallthru
      _
    // Predicated region
    $region10: #{tpu_custom_call.1} parent=1 // pred_check
      _
    $region11: #{tpu_custom_call.1} parent=1 // pred_check_branch
      %36 = sbr.rel (0) target = $region13
    $region12: #{tpu_custom_call.1} parent=1 // pred_region
      _
    $region13: #{tpu_custom_call.1} parent=1 // pred_fallthru
      _
    // Predicated region
    $region14: #{tpu_custom_call.1} parent=1 // pred_check
      _
    $region15: #{tpu_custom_call.1} parent=1 // pred_check_branch
      %38 = sbr.rel (0) target = $region17
    $region16: #{tpu_custom_call.1} parent=1 // pred_region
      _
    $region17: #{tpu_custom_call.1} parent=1 // pred_fallthru
      _
    // Predicated region
    $region18: #{tpu_custom_call.1} parent=1 // pred_check
      _
    $region19: #{tpu_custom_call.1} parent=1 // pred_check_branch
      %40 = sbr.rel (0) target = $region21
    $region20: #{tpu_custom_call.1} parent=1 // pred_region
      %41 = dma.done [#allocation3], 256
    $region21: #{tpu_custom_call.1} parent=1 // pred_fallthru
      _
    // Predicated region
    $region22: #{tpu_custom_call.1} parent=1 // pred_check
      _
    $region23: #{tpu_custom_call.1} parent=1 // pred_check_branch
      %43 = sbr.rel (0) target = $region25
    $region24: #{tpu_custom_call.1} parent=1 // pred_region
      %44 = dma.done [#allocation6], 128
    $region25: #{tpu_custom_call.1} parent=1 // pred_fallthru
      _
    %v45 = vld [vmem:[#allocation2] sm:$0xff]
    %v46 = vld [vmem:[#allocation2 + $0x8] sm:$0xff]
    %v47 = vlaneseq
    %v48 = vshrl.u32 %v47, 7
    %v49 = vadd.s32 %v48, 8
    %v50 = vadd.s32 %v48, 16
    %v51 = vadd.s32 %v48, 24
    %v52 = vadd.s32 %v48, 32
    %v53 = vadd.s32 %v48, 40
    %v54 = vadd.s32 %v48, 48
    %v55 = vadd.s32 %v48, 56
    %v56 = vadd.s32 %v48, 64
    %v57 = vadd.s32 %v48, 72
    %v58 = vadd.s32 %v48, 80
    %v59 = vadd.s32 %v48, 88
    %v60 = vadd.s32 %v48, 96
    %v61 = vadd.s32 %v48, 104
    %v62 = vadd.s32 %v48, 112
    %v63 = vadd.s32 %v48, 120
    %v64 = vadd.s32 %v48, 128
    %v65 = vadd.s32 %v48, 136
    %v66 = vadd.s32 %v48, 144
    %v67 = vadd.s32 %v48, 152
    %v68 = vadd.s32 %v48, 160
    %v69 = vadd.s32 %v48, 168
    %v70 = vadd.s32 %v48, 176
    %v71 = vadd.s32 %v48, 184
    %v72 = vadd.s32 %v48, 192
    %v73 = vadd.s32 %v48, 200
    %v74 = vadd.s32 %v48, 208
    %v75 = vadd.s32 %v48, 216
    %v76 = vadd.s32 %v48, 224
    %v77 = vadd.s32 %v48, 232
    %v78 = vadd.s32 %v48, 240
    %v79 = vadd.s32 %v48, 248
    %v80 = vlaneseq
    %v81 = vand.u32 %v80, 127
    %v82 = vmul.u32 %v81, 2
    %vm83 = vcmp.eq.s32.totalorder %v48, %v82
    %vm84 = vcmp.eq.s32.totalorder %v49, %v82
    %vm85 = vcmp.eq.s32.totalorder %v50, %v82
    %vm86 = vcmp.eq.s32.totalorder %v51, %v82
    %vm87 = vcmp.eq.s32.totalorder %v52, %v82
    %vm88 = vcmp.eq.s32.totalorder %v53, %v82
    %vm89 = vcmp.eq.s32.totalorder %v54, %v82
    %vm90 = vcmp.eq.s32.totalorder %v55, %v82
    %vm91 = vcmp.eq.s32.totalorder %v56, %v82
    %vm92 = vcmp.eq.s32.totalorder %v57, %v82
    %vm93 = vcmp.eq.s32.totalorder %v58, %v82
    %vm94 = vcmp.eq.s32.totalorder %v59, %v82
    %vm95 = vcmp.eq.s32.totalorder %v60, %v82
    %vm96 = vcmp.eq.s32.totalorder %v61, %v82
    %vm97 = vcmp.eq.s32.totalorder %v62, %v82
    %vm98 = vcmp.eq.s32.totalorder %v63, %v82
    %vm99 = vcmp.eq.s32.totalorder %v64, %v82
    %vm100 = vcmp.eq.s32.totalorder %v65, %v82
    %vm101 = vcmp.eq.s32.totalorder %v66, %v82
    %vm102 = vcmp.eq.s32.totalorder %v67, %v82
    %vm103 = vcmp.eq.s32.totalorder %v68, %v82
    %vm104 = vcmp.eq.s32.totalorder %v69, %v82
    %vm105 = vcmp.eq.s32.totalorder %v70, %v82
    %vm106 = vcmp.eq.s32.totalorder %v71, %v82
    %vm107 = vcmp.eq.s32.totalorder %v72, %v82
    %vm108 = vcmp.eq.s32.totalorder %v73, %v82
    %vm109 = vcmp.eq.s32.totalorder %v74, %v82
    %vm110 = vcmp.eq.s32.totalorder %v75, %v82
    %vm111 = vcmp.eq.s32.totalorder %v76, %v82
    %vm112 = vcmp.eq.s32.totalorder %v77, %v82
    %vm113 = vcmp.eq.s32.totalorder %v78, %v82
    %vm114 = vcmp.eq.s32.totalorder %v79, %v82
    %v115 = vsel %vm83, 1.0, 0.0
    %v116 = vsel %vm84, 1.0, 0.0
    %v117 = vsel %vm85, 1.0, 0.0
    %v118 = vsel %vm86, 1.0, 0.0
    %v119 = vsel %vm87, 1.0, 0.0
    %v120 = vsel %vm88, 1.0, 0.0
    %v121 = vsel %vm89, 1.0, 0.0
    %v122 = vsel %vm90, 1.0, 0.0
    %v123 = vsel %vm91, 1.0, 0.0
    %v124 = vsel %vm92, 1.0, 0.0
    %v125 = vsel %vm93, 1.0, 0.0
    %v126 = vsel %vm94, 1.0, 0.0
    %v127 = vsel %vm95, 1.0, 0.0
    %v128 = vsel %vm96, 1.0, 0.0
    %v129 = vsel %vm97, 1.0, 0.0
    %v130 = vsel %vm98, 1.0, 0.0
    %v131 = vsel %vm99, 1.0, 0.0
    %v132 = vsel %vm100, 1.0, 0.0
    %v133 = vsel %vm101, 1.0, 0.0
    %v134 = vsel %vm102, 1.0, 0.0
    %v135 = vsel %vm103, 1.0, 0.0
    %v136 = vsel %vm104, 1.0, 0.0
    %v137 = vsel %vm105, 1.0, 0.0
    %v138 = vsel %vm106, 1.0, 0.0
    %v139 = vsel %vm107, 1.0, 0.0
    %v140 = vsel %vm108, 1.0, 0.0
    %v141 = vsel %vm109, 1.0, 0.0
    %v142 = vsel %vm110, 1.0, 0.0
    %v143 = vsel %vm111, 1.0, 0.0
    %v144 = vsel %vm112, 1.0, 0.0
    %v145 = vsel %vm113, 1.0, 0.0
    %v146 = vsel %vm114, 1.0, 0.0
    %v147 = vadd.s32 %v82, 1
    %vm148 = vcmp.eq.s32.totalorder %v48, %v147
    %vm149 = vcmp.eq.s32.totalorder %v49, %v147
    %vm150 = vcmp.eq.s32.totalorder %v50, %v147
    %vm151 = vcmp.eq.s32.totalorder %v51, %v147
    %vm152 = vcmp.eq.s32.totalorder %v52, %v147
    %vm153 = vcmp.eq.s32.totalorder %v53, %v147
    %vm154 = vcmp.eq.s32.totalorder %v54, %v147
    %vm155 = vcmp.eq.s32.totalorder %v55, %v147
    %vm156 = vcmp.eq.s32.totalorder %v56, %v147
    %vm157 = vcmp.eq.s32.totalorder %v57, %v147
    %vm158 = vcmp.eq.s32.totalorder %v58, %v147
    %vm159 = vcmp.eq.s32.totalorder %v59, %v147
    %vm160 = vcmp.eq.s32.totalorder %v60, %v147
    %vm161 = vcmp.eq.s32.totalorder %v61, %v147
    %vm162 = vcmp.eq.s32.totalorder %v62, %v147
    %vm163 = vcmp.eq.s32.totalorder %v63, %v147
    %vm164 = vcmp.eq.s32.totalorder %v64, %v147
    %vm165 = vcmp.eq.s32.totalorder %v65, %v147
    %vm166 = vcmp.eq.s32.totalorder %v66, %v147
    %vm167 = vcmp.eq.s32.totalorder %v67, %v147
    %vm168 = vcmp.eq.s32.totalorder %v68, %v147
    %vm169 = vcmp.eq.s32.totalorder %v69, %v147
    %vm170 = vcmp.eq.s32.totalorder %v70, %v147
    %vm171 = vcmp.eq.s32.totalorder %v71, %v147
    %vm172 = vcmp.eq.s32.totalorder %v72, %v147
    %vm173 = vcmp.eq.s32.totalorder %v73, %v147
    %vm174 = vcmp.eq.s32.totalorder %v74, %v147
    %vm175 = vcmp.eq.s32.totalorder %v75, %v147
    %vm176 = vcmp.eq.s32.totalorder %v76, %v147
    %vm177 = vcmp.eq.s32.totalorder %v77, %v147
    %vm178 = vcmp.eq.s32.totalorder %v78, %v147
    %vm179 = vcmp.eq.s32.totalorder %v79, %v147
    %v180 = vsel %vm148, 1.0, 0.0
    %v181 = vsel %vm149, 1.0, 0.0
    %v182 = vsel %vm150, 1.0, 0.0
    %v183 = vsel %vm151, 1.0, 0.0
    %v184 = vsel %vm152, 1.0, 0.0
    %v185 = vsel %vm153, 1.0, 0.0
    %v186 = vsel %vm154, 1.0, 0.0
    %v187 = vsel %vm155, 1.0, 0.0
    %v188 = vsel %vm156, 1.0, 0.0
    %v189 = vsel %vm157, 1.0, 0.0
    %v190 = vsel %vm158, 1.0, 0.0
    %v191 = vsel %vm159, 1.0, 0.0
    %v192 = vsel %vm160, 1.0, 0.0
    %v193 = vsel %vm161, 1.0, 0.0
    %v194 = vsel %vm162, 1.0, 0.0
    %v195 = vsel %vm163, 1.0, 0.0
    %v196 = vsel %vm164, 1.0, 0.0
    %v197 = vsel %vm165, 1.0, 0.0
    %v198 = vsel %vm166, 1.0, 0.0
    %v199 = vsel %vm167, 1.0, 0.0
    %v200 = vsel %vm168, 1.0, 0.0
    %v201 = vsel %vm169, 1.0, 0.0
    %v202 = vsel %vm170, 1.0, 0.0
    %v203 = vsel %vm171, 1.0, 0.0
    %v204 = vsel %vm172, 1.0, 0.0
    %v205 = vsel %vm173, 1.0, 0.0
    %v206 = vsel %vm174, 1.0, 0.0
    %v207 = vsel %vm175, 1.0, 0.0
    %v208 = vsel %vm176, 1.0, 0.0
    %v209 = vsel %vm177, 1.0, 0.0
    %v210 = vsel %vm178, 1.0, 0.0
    %v211 = vsel %vm179, 1.0, 0.0
    %212 = vmatprep.subr.mxu0 0.0
    %213 = vmatpush1.msra.mxu0 %v115
    %214 = vmatprep.subr.mxu0 0.0
    %215 = vmatpush1.msra.mxu0 %v116
    %216 = vmatprep.subr.mxu0 0.0
    %217 = vmatpush1.msra.mxu0 %v117
    %218 = vmatprep.subr.mxu0 0.0
    %219 = vmatpush1.msra.mxu0 %v118
    %220 = vmatprep.subr.mxu0 0.0
    %221 = vmatpush1.msra.mxu0 %v119
    %222 = vmatprep.subr.mxu0 0.0
    %223 = vmatpush1.msra.mxu0 %v120
    %224 = vmatprep.subr.mxu0 0.0
    %225 = vmatpush1.msra.mxu0 %v121
    %226 = vmatprep.subr.mxu0 0.0
    %227 = vmatpush1.msra.mxu0 %v122
    %228 = vmatprep.subr.mxu0 0.0
    %229 = vmatpush1.msra.mxu0 %v123
    %230 = vmatprep.subr.mxu0 0.0
    %231 = vmatpush1.msra.mxu0 %v124
    %232 = vmatprep.subr.mxu0 0.0
    %233 = vmatpush1.msra.mxu0 %v125
    %234 = vmatprep.subr.mxu0 0.0
    %235 = vmatpush1.msra.mxu0 %v126
    %236 = vmatprep.subr.mxu0 0.0
    %237 = vmatpush1.msra.mxu0 %v127
    %238 = vmatprep.subr.mxu0 0.0
    %239 = vmatpush1.msra.mxu0 %v128
    %240 = vmatprep.subr.mxu0 0.0
    %241 = vmatpush1.msra.mxu0 %v129
    %242 = vmatprep.subr.mxu0 0.0
    %243 = vmatpush1.msra.mxu0 %v130
    %244 = vmatprep.subr.mxu0 0.0
    %245 = vmatpush1.msra.mxu0 %v131
    %246 = vmatprep.subr.mxu0 0.0
    %247 = vmatpush1.msra.mxu0 %v132
    %248 = vmatprep.subr.mxu0 0.0
    %249 = vmatpush1.msra.mxu0 %v133
    %250 = vmatprep.subr.mxu0 0.0
    %251 = vmatpush1.msra.mxu0 %v134
    %252 = vmatprep.subr.mxu0 0.0
    %253 = vmatpush1.msra.mxu0 %v135
    %254 = vmatprep.subr.mxu0 0.0
    %255 = vmatpush1.msra.mxu0 %v136
    %256 = vmatprep.subr.mxu0 0.0
    %257 = vmatpush1.msra.mxu0 %v137
    %258 = vmatprep.subr.mxu0 0.0
    %259 = vmatpush1.msra.mxu0 %v138
    %260 = vmatprep.subr.mxu0 0.0
    %261 = vmatpush1.msra.mxu0 %v139
    %262 = vmatprep.subr.mxu0 0.0
    %263 = vmatpush1.msra.mxu0 %v140
    %264 = vmatprep.subr.mxu0 0.0
    %265 = vmatpush1.msra.mxu0 %v141
    %266 = vmatprep.subr.mxu0 0.0
    %267 = vmatpush1.msra.mxu0 %v142
    %268 = vmatprep.subr.mxu0 0.0
    %269 = vmatpush1.msra.mxu0 %v143
    %270 = vmatprep.subr.mxu0 0.0
    %271 = vmatpush1.msra.mxu0 %v144
    %272 = vmatprep.subr.mxu0 0.0
    %273 = vmatpush1.msra.mxu0 %v145
    %274 = vmatprep.subr.mxu0 0.0
    %275 = vmatpush1.msra.mxu0 %v146
    %v276 = vand.u32 %v46, 4294901760
    %v277 = vsub.f32 %v46, %v276
    %v278 = vand.u32 %v277, 4294901760
    %v279 = vsub.f32 %v277, %v278
    %v280 = vand.u32 %v279, 4294901760
    %281 = vmatprep.mubr.f32.mxu0 %v280
    %v282 = vand.u32 %v45, 4294901760
    %v283 = vsub.f32 %v45, %v282
    %v284 = vand.u32 %v283, 4294901760
    %v285 = vsub.f32 %v283, %v284
    %v286 = vand.u32 %v285, 4294901760
    %287 = vmatmul.mubr.f32.gmra.mrb[0].mxu0 %v286
    %v288 = vpop.f32.mrb[0].mxu0
    %v289 = vadd.f32 0.0, %v288
    %v290 = vpop.f32.mrb[0].mxu0
    %291 = vdwg.mxu0
    %292 = vmatprep.subr.mxu0 0.0
    %v293 = vsub.f32 %v115, %v115
    %v294 = vand.u32 %v293, 4294901760
    %v295 = vsub.f32 %v293, %v294
    %v296 = vand.u32 %v295, 4294901760
    %297 = vmatpush1.msra.mxu0 %v296
    %298 = vmatprep.subr.mxu0 0.0
    %v299 = vsub.f32 %v116, %v116
    %v300 = vand.u32 %v299, 4294901760
    %v301 = vsub.f32 %v299, %v300
    %v302 = vand.u32 %v301, 4294901760
    %303 = vmatpush1.msra.mxu0 %v302
    %304 = vmatprep.subr.mxu0 0.0
    %v305 = vsub.f32 %v117, %v117
    %v306 = vand.u32 %v305, 4294901760
    %v307 = vsub.f32 %v305, %v306
    %v308 = vand.u32 %v307, 4294901760
    %309 = vmatpush1.msra.mxu0 %v308
    %310 = vmatprep.subr.mxu0 0.0
    %v311 = vsub.f32 %v118, %v118
    %v312 = vand.u32 %v311, 4294901760
    %v313 = vsub.f32 %v311, %v312
    %v314 = vand.u32 %v313, 4294901760
    %315 = vmatpush1.msra.mxu0 %v314
    %316 = vmatprep.subr.mxu0 0.0
    %v317 = vsub.f32 %v119, %v119
    %v318 = vand.u32 %v317, 4294901760
    %v319 = vsub.f32 %v317, %v318
    %v320 = vand.u32 %v319, 4294901760
    %321 = vmatpush1.msra.mxu0 %v320
    %322 = vmatprep.subr.mxu0 0.0
    %v323 = vsub.f32 %v120, %v120
    %v324 = vand.u32 %v323, 4294901760
    %v325 = vsub.f32 %v323, %v324
    %v326 = vand.u32 %v325, 4294901760
    %327 = vmatpush1.msra.mxu0 %v326
    %328 = vmatprep.subr.mxu0 0.0
    %v329 = vsub.f32 %v121, %v121
    %v330 = vand.u32 %v329, 4294901760
    %v331 = vsub.f32 %v329, %v330
    %v332 = vand.u32 %v331, 4294901760
    %333 = vmatpush1.msra.mxu0 %v332
    %334 = vmatprep.subr.mxu0 0.0
    %v335 = vsub.f32 %v122, %v122
    %v336 = vand.u32 %v335, 4294901760
    %v337 = vsub.f32 %v335, %v336
    %v338 = vand.u32 %v337, 4294901760
    %339 = vmatpush1.msra.mxu0 %v338
    %340 = vmatprep.subr.mxu0 0.0
    %v341 = vsub.f32 %v123, %v123
    %v342 = vand.u32 %v341, 4294901760
    %v343 = vsub.f32 %v341, %v342
    %v344 = vand.u32 %v343, 4294901760
    %345 = vmatpush1.msra.mxu0 %v344
    %346 = vmatprep.subr.mxu0 0.0
    %v347 = vsub.f32 %v124, %v124
    %v348 = vand.u32 %v347, 4294901760
    %v349 = vsub.f32 %v347, %v348
    %v350 = vand.u32 %v349, 4294901760
    %351 = vmatpush1.msra.mxu0 %v350
    %352 = vmatprep.subr.mxu0 0.0
    %v353 = vsub.f32 %v125, %v125
    %v354 = vand.u32 %v353, 4294901760
    %v355 = vsub.f32 %v353, %v354
    %v356 = vand.u32 %v355, 4294901760
    %357 = vmatpush1.msra.mxu0 %v356
    %358 = vmatprep.subr.mxu0 0.0
    %v359 = vsub.f32 %v126, %v126
    %v360 = vand.u32 %v359, 4294901760
    %v361 = vsub.f32 %v359, %v360
    %v362 = vand.u32 %v361, 4294901760
    %363 = vmatpush1.msra.mxu0 %v362
    %364 = vmatprep.subr.mxu0 0.0
    %v365 = vsub.f32 %v127, %v127
    %v366 = vand.u32 %v365, 4294901760
    %v367 = vsub.f32 %v365, %v366
    %v368 = vand.u32 %v367, 4294901760
    %369 = vmatpush1.msra.mxu0 %v368
    %370 = vmatprep.subr.mxu0 0.0
    %v371 = vsub.f32 %v128, %v128
    %v372 = vand.u32 %v371, 4294901760
    %v373 = vsub.f32 %v371, %v372
    %v374 = vand.u32 %v373, 4294901760
    %375 = vmatpush1.msra.mxu0 %v374
    %376 = vmatprep.subr.mxu0 0.0
    %v377 = vsub.f32 %v129, %v129
    %v378 = vand.u32 %v377, 4294901760
    %v379 = vsub.f32 %v377, %v378
    %v380 = vand.u32 %v379, 4294901760
    %381 = vmatpush1.msra.mxu0 %v380
    %382 = vmatprep.subr.mxu0 0.0
    %v383 = vsub.f32 %v130, %v130
    %v384 = vand.u32 %v383, 4294901760
    %v385 = vsub.f32 %v383, %v384
    %v386 = vand.u32 %v385, 4294901760
    %387 = vmatpush1.msra.mxu0 %v386
    %388 = vmatprep.subr.mxu0 0.0
    %v389 = vsub.f32 %v131, %v131
    %v390 = vand.u32 %v389, 4294901760
    %v391 = vsub.f32 %v389, %v390
    %v392 = vand.u32 %v391, 4294901760
    %393 = vmatpush1.msra.mxu0 %v392
    %394 = vmatprep.subr.mxu0 0.0
    %v395 = vsub.f32 %v132, %v132
    %v396 = vand.u32 %v395, 4294901760
    %v397 = vsub.f32 %v395, %v396
    %v398 = vand.u32 %v397, 4294901760
    %399 = vmatpush1.msra.mxu0 %v398
    %400 = vmatprep.subr.mxu0 0.0
    %v401 = vsub.f32 %v133, %v133
    %v402 = vand.u32 %v401, 4294901760
    %v403 = vsub.f32 %v401, %v402
    %v404 = vand.u32 %v403, 4294901760
    %405 = vmatpush1.msra.mxu0 %v404
    %406 = vmatprep.subr.mxu0 0.0
    %v407 = vsub.f32 %v134, %v134
    %v408 = vand.u32 %v407, 4294901760
    %v409 = vsub.f32 %v407, %v408
    %v410 = vand.u32 %v409, 4294901760
    %411 = vmatpush1.msra.mxu0 %v410
    %412 = vmatprep.subr.mxu0 0.0
    %v413 = vsub.f32 %v135, %v135
    %v414 = vand.u32 %v413, 4294901760
    %v415 = vsub.f32 %v413, %v414
    %v416 = vand.u32 %v415, 4294901760
    %417 = vmatpush1.msra.mxu0 %v416
    %418 = vmatprep.subr.mxu0 0.0
    %v419 = vsub.f32 %v136, %v136
    %v420 = vand.u32 %v419, 4294901760
    %v421 = vsub.f32 %v419, %v420
    %v422 = vand.u32 %v421, 4294901760
    %423 = vmatpush1.msra.mxu0 %v422
    %424 = vmatprep.subr.mxu0 0.0
    %v425 = vsub.f32 %v137, %v137
    %v426 = vand.u32 %v425, 4294901760
    %v427 = vsub.f32 %v425, %v426
    %v428 = vand.u32 %v427, 4294901760
    %429 = vmatpush1.msra.mxu0 %v428
    %430 = vmatprep.subr.mxu0 0.0
    %v431 = vsub.f32 %v138, %v138
    %v432 = vand.u32 %v431, 4294901760
    %v433 = vsub.f32 %v431, %v432
    %v434 = vand.u32 %v433, 4294901760
    %435 = vmatpush1.msra.mxu0 %v434
    %436 = vmatprep.subr.mxu0 0.0
    %v437 = vsub.f32 %v139, %v139
    %v438 = vand.u32 %v437, 4294901760
    %v439 = vsub.f32 %v437, %v438
    %v440 = vand.u32 %v439, 4294901760
    %441 = vmatpush1.msra.mxu0 %v440
    %442 = vmatprep.subr.mxu0 0.0
    %v443 = vsub.f32 %v140, %v140
    %v444 = vand.u32 %v443, 4294901760
    %v445 = vsub.f32 %v443, %v444
    %v446 = vand.u32 %v445, 4294901760
    %447 = vmatpush1.msra.mxu0 %v446
    %448 = vmatprep.subr.mxu0 0.0
    %v449 = vsub.f32 %v141, %v141
    %v450 = vand.u32 %v449, 4294901760
    %v451 = vsub.f32 %v449, %v450
    %v452 = vand.u32 %v451, 4294901760
    %453 = vmatpush1.msra.mxu0 %v452
    %454 = vmatprep.subr.mxu0 0.0
    %v455 = vsub.f32 %v142, %v142
    %v456 = vand.u32 %v455, 4294901760
    %v457 = vsub.f32 %v455, %v456
    %v458 = vand.u32 %v457, 4294901760
    %459 = vmatpush1.msra.mxu0 %v458
    %460 = vmatprep.subr.mxu0 0.0
    %v461 = vsub.f32 %v143, %v143
    %v462 = vand.u32 %v461, 4294901760
    %v463 = vsub.f32 %v461, %v462
    %v464 = vand.u32 %v463, 4294901760
    %465 = vmatpush1.msra.mxu0 %v464
    %466 = vmatprep.subr.mxu0 0.0
    %v467 = vsub.f32 %v144, %v144
    %v468 = vand.u32 %v467, 4294901760
    %v469 = vsub.f32 %v467, %v468
    %v470 = vand.u32 %v469, 4294901760
    %471 = vmatpush1.msra.mxu0 %v470
    %472 = vmatprep.subr.mxu0 0.0
    %v473 = vsub.f32 %v145, %v145
    %v474 = vand.u32 %v473, 4294901760
    %v475 = vsub.f32 %v473, %v474
    %v476 = vand.u32 %v475, 4294901760
    %477 = vmatpush1.msra.mxu0 %v476
    %478 = vmatprep.subr.mxu0 0.0
    %v479 = vsub.f32 %v146, %v146
    %v480 = vand.u32 %v479, 4294901760
    %v481 = vsub.f32 %v479, %v480
    %v482 = vand.u32 %v481, 4294901760
    %483 = vmatpush1.msra.mxu0 %v482
    %v484 = vand.u32 %v46, 4294901760
    %485 = vmatprep.mubr.f32.mxu0 %v484
    %v486 = vand.u32 %v45, 4294901760
    %487 = vmatmul.mubr.f32.gmra.mrb[0].mxu0 %v486
    %v488 = vpop.f32.mrb[0].mxu0
    %v489 = vadd.f32 %v289, %v488
    %v490 = vpop.f32.mrb[0].mxu0
    %491 = vdwg.mxu0
    %492 = vmatprep.subr.mxu0 0.0
    %v493 = vsub.f32 %v115, %v115
    %494 = vmatpush1.msra.mxu0 %v493
    %495 = vmatprep.subr.mxu0 0.0
    %v496 = vsub.f32 %v116, %v116
    %497 = vmatpush1.msra.mxu0 %v496
    %498 = vmatprep.subr.mxu0 0.0
    %v499 = vsub.f32 %v117, %v117
    %500 = vmatpush1.msra.mxu0 %v499
    %501 = vmatprep.subr.mxu0 0.0
    %v502 = vsub.f32 %v118, %v118
    %503 = vmatpush1.msra.mxu0 %v502
    %504 = vmatprep.subr.mxu0 0.0
    %v505 = vsub.f32 %v119, %v119
    %506 = vmatpush1.msra.mxu0 %v505
    %507 = vmatprep.subr.mxu0 0.0
    %v508 = vsub.f32 %v120, %v120
    %509 = vmatpush1.msra.mxu0 %v508
    %510 = vmatprep.subr.mxu0 0.0
    %v511 = vsub.f32 %v121, %v121
    %512 = vmatpush1.msra.mxu0 %v511
    %513 = vmatprep.subr.mxu0 0.0
    %v514 = vsub.f32 %v122, %v122
    %515 = vmatpush1.msra.mxu0 %v514
    %516 = vmatprep.subr.mxu0 0.0
    %v517 = vsub.f32 %v123, %v123
    %518 = vmatpush1.msra.mxu0 %v517
    %519 = vmatprep.subr.mxu0 0.0
    %v520 = vsub.f32 %v124, %v124
    %521 = vmatpush1.msra.mxu0 %v520
    %522 = vmatprep.subr.mxu0 0.0
    %v523 = vsub.f32 %v125, %v125
    %524 = vmatpush1.msra.mxu0 %v523
    %525 = vmatprep.subr.mxu0 0.0
    %v526 = vsub.f32 %v126, %v126
    %527 = vmatpush1.msra.mxu0 %v526
    %528 = vmatprep.subr.mxu0 0.0
    %v529 = vsub.f32 %v127, %v127
    %530 = vmatpush1.msra.mxu0 %v529
    %531 = vmatprep.subr.mxu0 0.0
    %v532 = vsub.f32 %v128, %v128
    %533 = vmatpush1.msra.mxu0 %v532
    %534 = vmatprep.subr.mxu0 0.0
    %v535 = vsub.f32 %v129, %v129
    %536 = vmatpush1.msra.mxu0 %v535
    %537 = vmatprep.subr.mxu0 0.0
    %v538 = vsub.f32 %v130, %v130
    %539 = vmatpush1.msra.mxu0 %v538
    %540 = vmatprep.subr.mxu0 0.0
    %v541 = vsub.f32 %v131, %v131
    %542 = vmatpush1.msra.mxu0 %v541
    %543 = vmatprep.subr.mxu0 0.0
    %v544 = vsub.f32 %v132, %v132
    %545 = vmatpush1.msra.mxu0 %v544
    %546 = vmatprep.subr.mxu0 0.0
    %v547 = vsub.f32 %v133, %v133
    %548 = vmatpush1.msra.mxu0 %v547
    %549 = vmatprep.subr.mxu0 0.0
    %v550 = vsub.f32 %v134, %v134
    %551 = vmatpush1.msra.mxu0 %v550
    %552 = vmatprep.subr.mxu0 0.0
    %v553 = vsub.f32 %v135, %v135
    %554 = vmatpush1.msra.mxu0 %v553
    %555 = vmatprep.subr.mxu0 0.0
    %v556 = vsub.f32 %v136, %v136
    %557 = vmatpush1.msra.mxu0 %v556
    %558 = vmatprep.subr.mxu0 0.0
    %v559 = vsub.f32 %v137, %v137
    %560 = vmatpush1.msra.mxu0 %v559
    %561 = vmatprep.subr.mxu0 0.0
    %v562 = vsub.f32 %v138, %v138
    %563 = vmatpush1.msra.mxu0 %v562
    %564 = vmatprep.subr.mxu0 0.0
    %v565 = vsub.f32 %v139, %v139
    %566 = vmatpush1.msra.mxu0 %v565
    %567 = vmatprep.subr.mxu0 0.0
    %v568 = vsub.f32 %v140, %v140
    %569 = vmatpush1.msra.mxu0 %v568
    %570 = vmatprep.subr.mxu0 0.0
    %v571 = vsub.f32 %v141, %v141
    %572 = vmatpush1.msra.mxu0 %v571
    %573 = vmatprep.subr.mxu0 0.0
    %v574 = vsub.f32 %v142, %v142
    %575 = vmatpush1.msra.mxu0 %v574
    %576 = vmatprep.subr.mxu0 0.0
    %v577 = vsub.f32 %v143, %v143
    %578 = vmatpush1.msra.mxu0 %v577
    %579 = vmatprep.subr.mxu0 0.0
    %v580 = vsub.f32 %v144, %v144
    %581 = vmatpush1.msra.mxu0 %v580
    %582 = vmatprep.subr.mxu0 0.0
    %v583 = vsub.f32 %v145, %v145
    %584 = vmatpush1.msra.mxu0 %v583
    %585 = vmatprep.subr.mxu0 0.0
    %v586 = vsub.f32 %v146, %v146
    %587 = vmatpush1.msra.mxu0 %v586
    %v588 = vand.u32 %v46, 4294901760
    %v589 = vsub.f32 %v46, %v588
    %590 = vmatprep.mubr.f32.mxu0 %v589
    %v591 = vand.u32 %v45, 4294901760
    %v592 = vsub.f32 %v45, %v591
    %593 = vmatmul.mubr.f32.gmra.mrb[0].mxu0 %v592
    %v594 = vpop.f32.mrb[0].mxu0
    %v595 = vadd.f32 %v489, %v594
    %v596 = vpop.f32.mrb[0].mxu0
    %597 = vdwg.mxu0
    %598 = vmatprep.subr.mxu0 0.0
    %599 = vmatpush1.msra.mxu0 %v115
    %600 = vmatprep.subr.mxu0 0.0
    %601 = vmatpush1.msra.mxu0 %v116
    %602 = vmatprep.subr.mxu0 0.0
    %603 = vmatpush1.msra.mxu0 %v117
    %604 = vmatprep.subr.mxu0 0.0
    %605 = vmatpush1.msra.mxu0 %v118
    %606 = vmatprep.subr.mxu0 0.0
    %607 = vmatpush1.msra.mxu0 %v119
    %608 = vmatprep.subr.mxu0 0.0
    %609 = vmatpush1.msra.mxu0 %v120
    %610 = vmatprep.subr.mxu0 0.0
    %611 = vmatpush1.msra.mxu0 %v121
    %612 = vmatprep.subr.mxu0 0.0
    %613 = vmatpush1.msra.mxu0 %v122
    %614 = vmatprep.subr.mxu0 0.0
    %615 = vmatpush1.msra.mxu0 %v123
    %616 = vmatprep.subr.mxu0 0.0
    %617 = vmatpush1.msra.mxu0 %v124
    %618 = vmatprep.subr.mxu0 0.0
    %619 = vmatpush1.msra.mxu0 %v125
    %620 = vmatprep.subr.mxu0 0.0
    %621 = vmatpush1.msra.mxu0 %v126
    %622 = vmatprep.subr.mxu0 0.0
    %623 = vmatpush1.msra.mxu0 %v127
    %624 = vmatprep.subr.mxu0 0.0
    %625 = vmatpush1.msra.mxu0 %v128
    %626 = vmatprep.subr.mxu0 0.0
    %627 = vmatpush1.msra.mxu0 %v129
    %628 = vmatprep.subr.mxu0 0.0
    %629 = vmatpush1.msra.mxu0 %v130
    %630 = vmatprep.subr.mxu0 0.0
    %631 = vmatpush1.msra.mxu0 %v131
    %632 = vmatprep.subr.mxu0 0.0
    %633 = vmatpush1.msra.mxu0 %v132
    %634 = vmatprep.subr.mxu0 0.0
    %635 = vmatpush1.msra.mxu0 %v133
    %636 = vmatprep.subr.mxu0 0.0
    %637 = vmatpush1.msra.mxu0 %v134
    %638 = vmatprep.subr.mxu0 0.0
    %639 = vmatpush1.msra.mxu0 %v135
    %640 = vmatprep.subr.mxu0 0.0
    %641 = vmatpush1.msra.mxu0 %v136
    %642 = vmatprep.subr.mxu0 0.0
    %643 = vmatpush1.msra.mxu0 %v137
    %644 = vmatprep.subr.mxu0 0.0
    %645 = vmatpush1.msra.mxu0 %v138
    %646 = vmatprep.subr.mxu0 0.0
    %647 = vmatpush1.msra.mxu0 %v139
    %648 = vmatprep.subr.mxu0 0.0
    %649 = vmatpush1.msra.mxu0 %v140
    %650 = vmatprep.subr.mxu0 0.0
    %651 = vmatpush1.msra.mxu0 %v141
    %652 = vmatprep.subr.mxu0 0.0
    %653 = vmatpush1.msra.mxu0 %v142
    %654 = vmatprep.subr.mxu0 0.0
    %655 = vmatpush1.msra.mxu0 %v143
    %656 = vmatprep.subr.mxu0 0.0
    %657 = vmatpush1.msra.mxu0 %v144
    %658 = vmatprep.subr.mxu0 0.0
    %659 = vmatpush1.msra.mxu0 %v145
    %660 = vmatprep.subr.mxu0 0.0
    %661 = vmatpush1.msra.mxu0 %v146
    %v662 = vand.u32 %v46, 4294901760
    %v663 = vsub.f32 %v46, %v662
    %v664 = vand.u32 %v663, 4294901760
    %665 = vmatprep.mubr.f32.mxu0 %v664
    %v666 = vand.u32 %v45, 4294901760
    %v667 = vsub.f32 %v45, %v666
    %v668 = vand.u32 %v667, 4294901760
    %669 = vmatmul.mubr.f32.gmra.mrb[0].mxu0 %v668
    %v670 = vpop.f32.mrb[0].mxu0
    %v671 = vadd.f32 %v595, %v670
    %v672 = vpop.f32.mrb[0].mxu0
    %673 = vdwg.mxu0
    %674 = vmatprep.subr.mxu0 0.0
    %v675 = vsub.f32 %v115, %v115
    %v676 = vand.u32 %v675, 4294901760
    %677 = vmatpush1.msra.mxu0 %v676
    %678 = vmatprep.subr.mxu0 0.0
    %v679 = vsub.f32 %v116, %v116
    %v680 = vand.u32 %v679, 4294901760
    %681 = vmatpush1.msra.mxu0 %v680
    %682 = vmatprep.subr.mxu0 0.0
    %v683 = vsub.f32 %v117, %v117
    %v684 = vand.u32 %v683, 4294901760
    %685 = vmatpush1.msra.mxu0 %v684
    %686 = vmatprep.subr.mxu0 0.0
    %v687 = vsub.f32 %v118, %v118
    %v688 = vand.u32 %v687, 4294901760
    %689 = vmatpush1.msra.mxu0 %v688
    %690 = vmatprep.subr.mxu0 0.0
    %v691 = vsub.f32 %v119, %v119
    %v692 = vand.u32 %v691, 4294901760
    %693 = vmatpush1.msra.mxu0 %v692
    %694 = vmatprep.subr.mxu0 0.0
    %v695 = vsub.f32 %v120, %v120
    %v696 = vand.u32 %v695, 4294901760
    %697 = vmatpush1.msra.mxu0 %v696
    %698 = vmatprep.subr.mxu0 0.0
    %v699 = vsub.f32 %v121, %v121
    %v700 = vand.u32 %v699, 4294901760
    %701 = vmatpush1.msra.mxu0 %v700
    %702 = vmatprep.subr.mxu0 0.0
    %v703 = vsub.f32 %v122, %v122
    %v704 = vand.u32 %v703, 4294901760
    %705 = vmatpush1.msra.mxu0 %v704
    %706 = vmatprep.subr.mxu0 0.0
    %v707 = vsub.f32 %v123, %v123
    %v708 = vand.u32 %v707, 4294901760
    %709 = vmatpush1.msra.mxu0 %v708
    %710 = vmatprep.subr.mxu0 0.0
    %v711 = vsub.f32 %v124, %v124
    %v712 = vand.u32 %v711, 4294901760
    %713 = vmatpush1.msra.mxu0 %v712
    %714 = vmatprep.subr.mxu0 0.0
    %v715 = vsub.f32 %v125, %v125
    %v716 = vand.u32 %v715, 4294901760
    %717 = vmatpush1.msra.mxu0 %v716
    %718 = vmatprep.subr.mxu0 0.0
    %v719 = vsub.f32 %v126, %v126
    %v720 = vand.u32 %v719, 4294901760
    %721 = vmatpush1.msra.mxu0 %v720
    %722 = vmatprep.subr.mxu0 0.0
    %v723 = vsub.f32 %v127, %v127
    %v724 = vand.u32 %v723, 4294901760
    %725 = vmatpush1.msra.mxu0 %v724
    %726 = vmatprep.subr.mxu0 0.0
    %v727 = vsub.f32 %v128, %v128
    %v728 = vand.u32 %v727, 4294901760
    %729 = vmatpush1.msra.mxu0 %v728
    %730 = vmatprep.subr.mxu0 0.0
    %v731 = vsub.f32 %v129, %v129
    %v732 = vand.u32 %v731, 4294901760
    %733 = vmatpush1.msra.mxu0 %v732
    %734 = vmatprep.subr.mxu0 0.0
    %v735 = vsub.f32 %v130, %v130
    %v736 = vand.u32 %v735, 4294901760
    %737 = vmatpush1.msra.mxu0 %v736
    %738 = vmatprep.subr.mxu0 0.0
    %v739 = vsub.f32 %v131, %v131
    %v740 = vand.u32 %v739, 4294901760
    %741 = vmatpush1.msra.mxu0 %v740
    %742 = vmatprep.subr.mxu0 0.0
    %v743 = vsub.f32 %v132, %v132
    %v744 = vand.u32 %v743, 4294901760
    %745 = vmatpush1.msra.mxu0 %v744
    %746 = vmatprep.subr.mxu0 0.0
    %v747 = vsub.f32 %v133, %v133
    %v748 = vand.u32 %v747, 4294901760
    %749 = vmatpush1.msra.mxu0 %v748
    %750 = vmatprep.subr.mxu0 0.0
    %v751 = vsub.f32 %v134, %v134
    %v752 = vand.u32 %v751, 4294901760
    %753 = vmatpush1.msra.mxu0 %v752
    %754 = vmatprep.subr.mxu0 0.0
    %v755 = vsub.f32 %v135, %v135
    %v756 = vand.u32 %v755, 4294901760
    %757 = vmatpush1.msra.mxu0 %v756
    %758 = vmatprep.subr.mxu0 0.0
    %v759 = vsub.f32 %v136, %v136
    %v760 = vand.u32 %v759, 4294901760
    %761 = vmatpush1.msra.mxu0 %v760
    %762 = vmatprep.subr.mxu0 0.0
    %v763 = vsub.f32 %v137, %v137
    %v764 = vand.u32 %v763, 4294901760
    %765 = vmatpush1.msra.mxu0 %v764
    %766 = vmatprep.subr.mxu0 0.0
    %v767 = vsub.f32 %v138, %v138
    %v768 = vand.u32 %v767, 4294901760
    %769 = vmatpush1.msra.mxu0 %v768
    %770 = vmatprep.subr.mxu0 0.0
    %v771 = vsub.f32 %v139, %v139
    %v772 = vand.u32 %v771, 4294901760
    %773 = vmatpush1.msra.mxu0 %v772
    %774 = vmatprep.subr.mxu0 0.0
    %v775 = vsub.f32 %v140, %v140
    %v776 = vand.u32 %v775, 4294901760
    %777 = vmatpush1.msra.mxu0 %v776
    %778 = vmatprep.subr.mxu0 0.0
    %v779 = vsub.f32 %v141, %v141
    %v780 = vand.u32 %v779, 4294901760
    %781 = vmatpush1.msra.mxu0 %v780
    %782 = vmatprep.subr.mxu0 0.0
    %v783 = vsub.f32 %v142, %v142
    %v784 = vand.u32 %v783, 4294901760
    %785 = vmatpush1.msra.mxu0 %v784
    %786 = vmatprep.subr.mxu0 0.0
    %v787 = vsub.f32 %v143, %v143
    %v788 = vand.u32 %v787, 4294901760
    %789 = vmatpush1.msra.mxu0 %v788
    %790 = vmatprep.subr.mxu0 0.0
    %v791 = vsub.f32 %v144, %v144
    %v792 = vand.u32 %v791, 4294901760
    %793 = vmatpush1.msra.mxu0 %v792
    %794 = vmatprep.subr.mxu0 0.0
    %v795 = vsub.f32 %v145, %v145
    %v796 = vand.u32 %v795, 4294901760
    %797 = vmatpush1.msra.mxu0 %v796
    %798 = vmatprep.subr.mxu0 0.0
    %v799 = vsub.f32 %v146, %v146
    %v800 = vand.u32 %v799, 4294901760
    %801 = vmatpush1.msra.mxu0 %v800
    %v802 = vand.u32 %v46, 4294901760
    %803 = vmatprep.mubr.f32.mxu0 %v802
    %v804 = vand.u32 %v45, 4294901760
    %805 = vmatmul.mubr.f32.gmra.mrb[0].mxu0 %v804
    %v806 = vpop.f32.mrb[0].mxu0
    %v807 = vadd.f32 %v671, %v806
    %v808 = vpop.f32.mrb[0].mxu0
    %809 = vdwg.mxu0
    %810 = vmatprep.subr.mxu0 0.0
    %811 = vmatpush1.msra.mxu0 %v115
    %812 = vmatprep.subr.mxu0 0.0
    %813 = vmatpush1.msra.mxu0 %v116
    %814 = vmatprep.subr.mxu0 0.0
    %815 = vmatpush1.msra.mxu0 %v117
    %816 = vmatprep.subr.mxu0 0.0
    %817 = vmatpush1.msra.mxu0 %v118
    %818 = vmatprep.subr.mxu0 0.0
    %819 = vmatpush1.msra.mxu0 %v119
    %820 = vmatprep.subr.mxu0 0.0
    %821 = vmatpush1.msra.mxu0 %v120
    %822 = vmatprep.subr.mxu0 0.0
    %823 = vmatpush1.msra.mxu0 %v121
    %824 = vmatprep.subr.mxu0 0.0
    %825 = vmatpush1.msra.mxu0 %v122
    %826 = vmatprep.subr.mxu0 0.0
    %827 = vmatpush1.msra.mxu0 %v123
    %828 = vmatprep.subr.mxu0 0.0
    %829 = vmatpush1.msra.mxu0 %v124
    %830 = vmatprep.subr.mxu0 0.0
    %831 = vmatpush1.msra.mxu0 %v125
    %832 = vmatprep.subr.mxu0 0.0
    %833 = vmatpush1.msra.mxu0 %v126
    %834 = vmatprep.subr.mxu0 0.0
    %835 = vmatpush1.msra.mxu0 %v127
    %836 = vmatprep.subr.mxu0 0.0
    %837 = vmatpush1.msra.mxu0 %v128
    %838 = vmatprep.subr.mxu0 0.0
    %839 = vmatpush1.msra.mxu0 %v129
    %840 = vmatprep.subr.mxu0 0.0
    %841 = vmatpush1.msra.mxu0 %v130
    %842 = vmatprep.subr.mxu0 0.0
    %843 = vmatpush1.msra.mxu0 %v131
    %844 = vmatprep.subr.mxu0 0.0
    %845 = vmatpush1.msra.mxu0 %v132
    %846 = vmatprep.subr.mxu0 0.0
    %847 = vmatpush1.msra.mxu0 %v133
    %848 = vmatprep.subr.mxu0 0.0
    %849 = vmatpush1.msra.mxu0 %v134
    %850 = vmatprep.subr.mxu0 0.0
    %851 = vmatpush1.msra.mxu0 %v135
    %852 = vmatprep.subr.mxu0 0.0
    %853 = vmatpush1.msra.mxu0 %v136
    %854 = vmatprep.subr.mxu0 0.0
    %855 = vmatpush1.msra.mxu0 %v137
    %856 = vmatprep.subr.mxu0 0.0
    %857 = vmatpush1.msra.mxu0 %v138
    %858 = vmatprep.subr.mxu0 0.0
    %859 = vmatpush1.msra.mxu0 %v139
    %860 = vmatprep.subr.mxu0 0.0
    %861 = vmatpush1.msra.mxu0 %v140
    %862 = vmatprep.subr.mxu0 0.0
    %863 = vmatpush1.msra.mxu0 %v141
    %864 = vmatprep.subr.mxu0 0.0
    %865 = vmatpush1.msra.mxu0 %v142
    %866 = vmatprep.subr.mxu0 0.0
    %867 = vmatpush1.msra.mxu0 %v143
    %868 = vmatprep.subr.mxu0 0.0
    %869 = vmatpush1.msra.mxu0 %v144
    %870 = vmatprep.subr.mxu0 0.0
    %871 = vmatpush1.msra.mxu0 %v145
    %872 = vmatprep.subr.mxu0 0.0
    %873 = vmatpush1.msra.mxu0 %v146
    %v874 = vand.u32 %v46, 4294901760
    %875 = vmatprep.mubr.f32.mxu0 %v874
    %v876 = vand.u32 %v45, 4294901760
    %877 = vmatmul.mubr.f32.gmra.mrb[0].mxu0 %v876
    %v878 = vpop.f32.mrb[0].mxu0
    %v879 = vadd.f32 %v807, %v878
    %v880 = vpop.f32.mrb[0].mxu0
    %881 = vdwg.mxu0
    %882 = vmatprep.subr.mxu0 0.0
    %883 = vmatpush1.msra.mxu0 %v180
    %884 = vmatprep.subr.mxu0 0.0
    %885 = vmatpush1.msra.mxu0 %v181
    %886 = vmatprep.subr.mxu0 0.0
    %887 = vmatpush1.msra.mxu0 %v182
    %888 = vmatprep.subr.mxu0 0.0
    %889 = vmatpush1.msra.mxu0 %v183
    %890 = vmatprep.subr.mxu0 0.0
    %891 = vmatpush1.msra.mxu0 %v184
    %892 = vmatprep.subr.mxu0 0.0
    %893 = vmatpush1.msra.mxu0 %v185
    %894 = vmatprep.subr.mxu0 0.0
    %895 = vmatpush1.msra.mxu0 %v186
    %896 = vmatprep.subr.mxu0 0.0
    %897 = vmatpush1.msra.mxu0 %v187
    %898 = vmatprep.subr.mxu0 0.0
    %899 = vmatpush1.msra.mxu0 %v188
    %900 = vmatprep.subr.mxu0 0.0
    %901 = vmatpush1.msra.mxu0 %v189
    %902 = vmatprep.subr.mxu0 0.0
    %903 = vmatpush1.msra.mxu0 %v190
    %904 = vmatprep.subr.mxu0 0.0
    %905 = vmatpush1.msra.mxu0 %v191
    %906 = vmatprep.subr.mxu0 0.0
    %907 = vmatpush1.msra.mxu0 %v192
    %908 = vmatprep.subr.mxu0 0.0
    %909 = vmatpush1.msra.mxu0 %v193
    %910 = vmatprep.subr.mxu0 0.0
    %911 = vmatpush1.msra.mxu0 %v194
    %912 = vmatprep.subr.mxu0 0.0
    %913 = vmatpush1.msra.mxu0 %v195
    %914 = vmatprep.subr.mxu0 0.0
    %915 = vmatpush1.msra.mxu0 %v196
    %916 = vmatprep.subr.mxu0 0.0
    %917 = vmatpush1.msra.mxu0 %v197
    %918 = vmatprep.subr.mxu0 0.0
    %919 = vmatpush1.msra.mxu0 %v198
    %920 = vmatprep.subr.mxu0 0.0
    %921 = vmatpush1.msra.mxu0 %v199
    %922 = vmatprep.subr.mxu0 0.0
    %923 = vmatpush1.msra.mxu0 %v200
    %924 = vmatprep.subr.mxu0 0.0
    %925 = vmatpush1.msra.mxu0 %v201
    %926 = vmatprep.subr.mxu0 0.0
    %927 = vmatpush1.msra.mxu0 %v202
    %928 = vmatprep.subr.mxu0 0.0
    %929 = vmatpush1.msra.mxu0 %v203
    %930 = vmatprep.subr.mxu0 0.0
    %931 = vmatpush1.msra.mxu0 %v204
    %932 = vmatprep.subr.mxu0 0.0
    %933 = vmatpush1.msra.mxu0 %v205
    %934 = vmatprep.subr.mxu0 0.0
    %935 = vmatpush1.msra.mxu0 %v206
    %936 = vmatprep.subr.mxu0 0.0
    %937 = vmatpush1.msra.mxu0 %v207
    %938 = vmatprep.subr.mxu0 0.0
    %939 = vmatpush1.msra.mxu0 %v208
    %940 = vmatprep.subr.mxu0 0.0
    %941 = vmatpush1.msra.mxu0 %v209
    %942 = vmatprep.subr.mxu0 0.0
    %943 = vmatpush1.msra.mxu0 %v210
    %944 = vmatprep.subr.mxu0 0.0
    %945 = vmatpush1.msra.mxu0 %v211
    %v946 = vand.u32 %v46, 4294901760
    %v947 = vsub.f32 %v46, %v946
    %v948 = vand.u32 %v947, 4294901760
    %v949 = vsub.f32 %v947, %v948
    %v950 = vand.u32 %v949, 4294901760
    %951 = vmatprep.mubr.f32.mxu0 %v950
    %v952 = vand.u32 %v45, 4294901760
    %v953 = vsub.f32 %v45, %v952
    %v954 = vand.u32 %v953, 4294901760
    %v955 = vsub.f32 %v953, %v954
    %v956 = vand.u32 %v955, 4294901760
    %957 = vmatmul.mubr.f32.gmra.mrb[0].mxu0 %v956
    %v958 = vpop.f32.mrb[0].mxu0
    %v959 = vadd.f32 0.0, %v958
    %v960 = vpop.f32.mrb[0].mxu0
    %961 = vdwg.mxu0
    %962 = vmatprep.subr.mxu0 0.0
    %v963 = vsub.f32 %v180, %v180
    %v964 = vand.u32 %v963, 4294901760
    %v965 = vsub.f32 %v963, %v964
    %v966 = vand.u32 %v965, 4294901760
    %967 = vmatpush1.msra.mxu0 %v966
    %968 = vmatprep.subr.mxu0 0.0
    %v969 = vsub.f32 %v181, %v181
    %v970 = vand.u32 %v969, 4294901760
    %v971 = vsub.f32 %v969, %v970
    %v972 = vand.u32 %v971, 4294901760
    %973 = vmatpush1.msra.mxu0 %v972
    %974 = vmatprep.subr.mxu0 0.0
    %v975 = vsub.f32 %v182, %v182
    %v976 = vand.u32 %v975, 4294901760
    %v977 = vsub.f32 %v975, %v976
    %v978 = vand.u32 %v977, 4294901760
    %979 = vmatpush1.msra.mxu0 %v978
    %980 = vmatprep.subr.mxu0 0.0
    %v981 = vsub.f32 %v183, %v183
    %v982 = vand.u32 %v981, 4294901760
    %v983 = vsub.f32 %v981, %v982
    %v984 = vand.u32 %v983, 4294901760
    %985 = vmatpush1.msra.mxu0 %v984
    %986 = vmatprep.subr.mxu0 0.0
    %v987 = vsub.f32 %v184, %v184
    %v988 = vand.u32 %v987, 4294901760
    %v989 = vsub.f32 %v987, %v988
    %v990 = vand.u32 %v989, 4294901760
    %991 = vmatpush1.msra.mxu0 %v990
    %992 = vmatprep.subr.mxu0 0.0
    %v993 = vsub.f32 %v185, %v185
    %v994 = vand.u32 %v993, 4294901760
    %v995 = vsub.f32 %v993, %v994
    %v996 = vand.u32 %v995, 4294901760
    %997 = vmatpush1.msra.mxu0 %v996
    %998 = vmatprep.subr.mxu0 0.0
    %v999 = vsub.f32 %v186, %v186
    %v1000 = vand.u32 %v999, 4294901760
    %v1001 = vsub.f32 %v999, %v1000
    %v1002 = vand.u32 %v1001, 4294901760
    %1003 = vmatpush1.msra.mxu0 %v1002
    %1004 = vmatprep.subr.mxu0 0.0
    %v1005 = vsub.f32 %v187, %v187
    %v1006 = vand.u32 %v1005, 4294901760
    %v1007 = vsub.f32 %v1005, %v1006
    %v1008 = vand.u32 %v1007, 4294901760
    %1009 = vmatpush1.msra.mxu0 %v1008
    %1010 = vmatprep.subr.mxu0 0.0
    %v1011 = vsub.f32 %v188, %v188
    %v1012 = vand.u32 %v1011, 4294901760
    %v1013 = vsub.f32 %v1011, %v1012
    %v1014 = vand.u32 %v1013, 4294901760
    %1015 = vmatpush1.msra.mxu0 %v1014
    %1016 = vmatprep.subr.mxu0 0.0
    %v1017 = vsub.f32 %v189, %v189
    %v1018 = vand.u32 %v1017, 4294901760
    %v1019 = vsub.f32 %v1017, %v1018
    %v1020 = vand.u32 %v1019, 4294901760
    %1021 = vmatpush1.msra.mxu0 %v1020
    %1022 = vmatprep.subr.mxu0 0.0
    %v1023 = vsub.f32 %v190, %v190
    %v1024 = vand.u32 %v1023, 4294901760
    %v1025 = vsub.f32 %v1023, %v1024
    %v1026 = vand.u32 %v1025, 4294901760
    %1027 = vmatpush1.msra.mxu0 %v1026
    %1028 = vmatprep.subr.mxu0 0.0
    %v1029 = vsub.f32 %v191, %v191
    %v1030 = vand.u32 %v1029, 4294901760
    %v1031 = vsub.f32 %v1029, %v1030
    %v1032 = vand.u32 %v1031, 4294901760
    %1033 = vmatpush1.msra.mxu0 %v1032
    %1034 = vmatprep.subr.mxu0 0.0
    %v1035 = vsub.f32 %v192, %v192
    %v1036 = vand.u32 %v1035, 4294901760
    %v1037 = vsub.f32 %v1035, %v1036
    %v1038 = vand.u32 %v1037, 4294901760
    %1039 = vmatpush1.msra.mxu0 %v1038
    %1040 = vmatprep.subr.mxu0 0.0
    %v1041 = vsub.f32 %v193, %v193
    %v1042 = vand.u32 %v1041, 4294901760
    %v1043 = vsub.f32 %v1041, %v1042
    %v1044 = vand.u32 %v1043, 4294901760
    %1045 = vmatpush1.msra.mxu0 %v1044
    %1046 = vmatprep.subr.mxu0 0.0
    %v1047 = vsub.f32 %v194, %v194
    %v1048 = vand.u32 %v1047, 4294901760
    %v1049 = vsub.f32 %v1047, %v1048
    %v1050 = vand.u32 %v1049, 4294901760
    %1051 = vmatpush1.msra.mxu0 %v1050
    %1052 = vmatprep.subr.mxu0 0.0
    %v1053 = vsub.f32 %v195, %v195
    %v1054 = vand.u32 %v1053, 4294901760
    %v1055 = vsub.f32 %v1053, %v1054
    %v1056 = vand.u32 %v1055, 4294901760
    %1057 = vmatpush1.msra.mxu0 %v1056
    %1058 = vmatprep.subr.mxu0 0.0
    %v1059 = vsub.f32 %v196, %v196
    %v1060 = vand.u32 %v1059, 4294901760
    %v1061 = vsub.f32 %v1059, %v1060
    %v1062 = vand.u32 %v1061, 4294901760
    %1063 = vmatpush1.msra.mxu0 %v1062
    %1064 = vmatprep.subr.mxu0 0.0
    %v1065 = vsub.f32 %v197, %v197
    %v1066 = vand.u32 %v1065, 4294901760
    %v1067 = vsub.f32 %v1065, %v1066
    %v1068 = vand.u32 %v1067, 4294901760
    %1069 = vmatpush1.msra.mxu0 %v1068
    %1070 = vmatprep.subr.mxu0 0.0
    %v1071 = vsub.f32 %v198, %v198
    %v1072 = vand.u32 %v1071, 4294901760
    %v1073 = vsub.f32 %v1071, %v1072
    %v1074 = vand.u32 %v1073, 4294901760
    %1075 = vmatpush1.msra.mxu0 %v1074
    %1076 = vmatprep.subr.mxu0 0.0
    %v1077 = vsub.f32 %v199, %v199
    %v1078 = vand.u32 %v1077, 4294901760
    %v1079 = vsub.f32 %v1077, %v1078
    %v1080 = vand.u32 %v1079, 4294901760
    %1081 = vmatpush1.msra.mxu0 %v1080
    %1082 = vmatprep.subr.mxu0 0.0
    %v1083 = vsub.f32 %v200, %v200
    %v1084 = vand.u32 %v1083, 4294901760
    %v1085 = vsub.f32 %v1083, %v1084
    %v1086 = vand.u32 %v1085, 4294901760
    %1087 = vmatpush1.msra.mxu0 %v1086
    %1088 = vmatprep.subr.mxu0 0.0
    %v1089 = vsub.f32 %v201, %v201
    %v1090 = vand.u32 %v1089, 4294901760
    %v1091 = vsub.f32 %v1089, %v1090
    %v1092 = vand.u32 %v1091, 4294901760
    %1093 = vmatpush1.msra.mxu0 %v1092
    %1094 = vmatprep.subr.mxu0 0.0
    %v1095 = vsub.f32 %v202, %v202
    %v1096 = vand.u32 %v1095, 4294901760
    %v1097 = vsub.f32 %v1095, %v1096
    %v1098 = vand.u32 %v1097, 4294901760
    %1099 = vmatpush1.msra.mxu0 %v1098
    %1100 = vmatprep.subr.mxu0 0.0
    %v1101 = vsub.f32 %v203, %v203
    %v1102 = vand.u32 %v1101, 4294901760
    %v1103 = vsub.f32 %v1101, %v1102
    %v1104 = vand.u32 %v1103, 4294901760
    %1105 = vmatpush1.msra.mxu0 %v1104
    %1106 = vmatprep.subr.mxu0 0.0
    %v1107 = vsub.f32 %v204, %v204
    %v1108 = vand.u32 %v1107, 4294901760
    %v1109 = vsub.f32 %v1107, %v1108
    %v1110 = vand.u32 %v1109, 4294901760
    %1111 = vmatpush1.msra.mxu0 %v1110
    %1112 = vmatprep.subr.mxu0 0.0
    %v1113 = vsub.f32 %v205, %v205
    %v1114 = vand.u32 %v1113, 4294901760
    %v1115 = vsub.f32 %v1113, %v1114
    %v1116 = vand.u32 %v1115, 4294901760
    %1117 = vmatpush1.msra.mxu0 %v1116
    %1118 = vmatprep.subr.mxu0 0.0
    %v1119 = vsub.f32 %v206, %v206
    %v1120 = vand.u32 %v1119, 4294901760
    %v1121 = vsub.f32 %v1119, %v1120
    %v1122 = vand.u32 %v1121, 4294901760
    %1123 = vmatpush1.msra.mxu0 %v1122
    %1124 = vmatprep.subr.mxu0 0.0
    %v1125 = vsub.f32 %v207, %v207
    %v1126 = vand.u32 %v1125, 4294901760
    %v1127 = vsub.f32 %v1125, %v1126
    %v1128 = vand.u32 %v1127, 4294901760
    %1129 = vmatpush1.msra.mxu0 %v1128
    %1130 = vmatprep.subr.mxu0 0.0
    %v1131 = vsub.f32 %v208, %v208
    %v1132 = vand.u32 %v1131, 4294901760
    %v1133 = vsub.f32 %v1131, %v1132
    %v1134 = vand.u32 %v1133, 4294901760
    %1135 = vmatpush1.msra.mxu0 %v1134
    %1136 = vmatprep.subr.mxu0 0.0
    %v1137 = vsub.f32 %v209, %v209
    %v1138 = vand.u32 %v1137, 4294901760
    %v1139 = vsub.f32 %v1137, %v1138
    %v1140 = vand.u32 %v1139, 4294901760
    %1141 = vmatpush1.msra.mxu0 %v1140
    %1142 = vmatprep.subr.mxu0 0.0
    %v1143 = vsub.f32 %v210, %v210
    %v1144 = vand.u32 %v1143, 4294901760
    %v1145 = vsub.f32 %v1143, %v1144
    %v1146 = vand.u32 %v1145, 4294901760
    %1147 = vmatpush1.msra.mxu0 %v1146
    %1148 = vmatprep.subr.mxu0 0.0
    %v1149 = vsub.f32 %v211, %v211
    %v1150 = vand.u32 %v1149, 4294901760
    %v1151 = vsub.f32 %v1149, %v1150
    %v1152 = vand.u32 %v1151, 4294901760
    %1153 = vmatpush1.msra.mxu0 %v1152
    %v1154 = vand.u32 %v46, 4294901760
    %1155 = vmatprep.mubr.f32.mxu0 %v1154
    %v1156 = vand.u32 %v45, 4294901760
    %1157 = vmatmul.mubr.f32.gmra.mrb[0].mxu0 %v1156
    %v1158 = vpop.f32.mrb[0].mxu0
    %v1159 = vadd.f32 %v959, %v1158
    %v1160 = vpop.f32.mrb[0].mxu0
    %1161 = vdwg.mxu0
    %1162 = vmatprep.subr.mxu0 0.0
    %v1163 = vsub.f32 %v180, %v180
    %1164 = vmatpush1.msra.mxu0 %v1163
    %1165 = vmatprep.subr.mxu0 0.0
    %v1166 = vsub.f32 %v181, %v181
    %1167 = vmatpush1.msra.mxu0 %v1166
    %1168 = vmatprep.subr.mxu0 0.0
    %v1169 = vsub.f32 %v182, %v182
    %1170 = vmatpush1.msra.mxu0 %v1169
    %1171 = vmatprep.subr.mxu0 0.0
    %v1172 = vsub.f32 %v183, %v183
    %1173 = vmatpush1.msra.mxu0 %v1172
    %1174 = vmatprep.subr.mxu0 0.0
    %v1175 = vsub.f32 %v184, %v184
    %1176 = vmatpush1.msra.mxu0 %v1175
    %1177 = vmatprep.subr.mxu0 0.0
    %v1178 = vsub.f32 %v185, %v185
    %1179 = vmatpush1.msra.mxu0 %v1178
    %1180 = vmatprep.subr.mxu0 0.0
    %v1181 = vsub.f32 %v186, %v186
    %1182 = vmatpush1.msra.mxu0 %v1181
    %1183 = vmatprep.subr.mxu0 0.0
    %v1184 = vsub.f32 %v187, %v187
    %1185 = vmatpush1.msra.mxu0 %v1184
    %1186 = vmatprep.subr.mxu0 0.0
    %v1187 = vsub.f32 %v188, %v188
    %1188 = vmatpush1.msra.mxu0 %v1187
    %1189 = vmatprep.subr.mxu0 0.0
    %v1190 = vsub.f32 %v189, %v189
    %1191 = vmatpush1.msra.mxu0 %v1190
    %1192 = vmatprep.subr.mxu0 0.0
    %v1193 = vsub.f32 %v190, %v190
    %1194 = vmatpush1.msra.mxu0 %v1193
    %1195 = vmatprep.subr.mxu0 0.0
    %v1196 = vsub.f32 %v191, %v191
    %1197 = vmatpush1.msra.mxu0 %v1196
    %1198 = vmatprep.subr.mxu0 0.0
    %v1199 = vsub.f32 %v192, %v192
    %1200 = vmatpush1.msra.mxu0 %v1199
    %1201 = vmatprep.subr.mxu0 0.0
    %v1202 = vsub.f32 %v193, %v193
    %1203 = vmatpush1.msra.mxu0 %v1202
    %1204 = vmatprep.subr.mxu0 0.0
    %v1205 = vsub.f32 %v194, %v194
    %1206 = vmatpush1.msra.mxu0 %v1205
    %1207 = vmatprep.subr.mxu0 0.0
    %v1208 = vsub.f32 %v195, %v195
    %1209 = vmatpush1.msra.mxu0 %v1208
    %1210 = vmatprep.subr.mxu0 0.0
    %v1211 = vsub.f32 %v196, %v196
    %1212 = vmatpush1.msra.mxu0 %v1211
    %1213 = vmatprep.subr.mxu0 0.0
    %v1214 = vsub.f32 %v197, %v197
    %1215 = vmatpush1.msra.mxu0 %v1214
    %1216 = vmatprep.subr.mxu0 0.0
    %v1217 = vsub.f32 %v198, %v198
    %1218 = vmatpush1.msra.mxu0 %v1217
    %1219 = vmatprep.subr.mxu0 0.0
    %v1220 = vsub.f32 %v199, %v199
    %1221 = vmatpush1.msra.mxu0 %v1220
    %1222 = vmatprep.subr.mxu0 0.0
    %v1223 = vsub.f32 %v200, %v200
    %1224 = vmatpush1.msra.mxu0 %v1223
    %1225 = vmatprep.subr.mxu0 0.0
    %v1226 = vsub.f32 %v201, %v201
    %1227 = vmatpush1.msra.mxu0 %v1226
    %1228 = vmatprep.subr.mxu0 0.0
    %v1229 = vsub.f32 %v202, %v202
    %1230 = vmatpush1.msra.mxu0 %v1229
    %1231 = vmatprep.subr.mxu0 0.0
    %v1232 = vsub.f32 %v203, %v203
    %1233 = vmatpush1.msra.mxu0 %v1232
    %1234 = vmatprep.subr.mxu0 0.0
    %v1235 = vsub.f32 %v204, %v204
    %1236 = vmatpush1.msra.mxu0 %v1235
    %1237 = vmatprep.subr.mxu0 0.0
    %v1238 = vsub.f32 %v205, %v205
    %1239 = vmatpush1.msra.mxu0 %v1238
    %1240 = vmatprep.subr.mxu0 0.0
    %v1241 = vsub.f32 %v206, %v206
    %1242 = vmatpush1.msra.mxu0 %v1241
    %1243 = vmatprep.subr.mxu0 0.0
    %v1244 = vsub.f32 %v207, %v207
    %1245 = vmatpush1.msra.mxu0 %v1244
    %1246 = vmatprep.subr.mxu0 0.0
    %v1247 = vsub.f32 %v208, %v208
    %1248 = vmatpush1.msra.mxu0 %v1247
    %1249 = vmatprep.subr.mxu0 0.0
    %v1250 = vsub.f32 %v209, %v209
    %1251 = vmatpush1.msra.mxu0 %v1250
    %1252 = vmatprep.subr.mxu0 0.0
    %v1253 = vsub.f32 %v210, %v210
    %1254 = vmatpush1.msra.mxu0 %v1253
    %1255 = vmatprep.subr.mxu0 0.0
    %v1256 = vsub.f32 %v211, %v211
    %1257 = vmatpush1.msra.mxu0 %v1256
    %v1258 = vand.u32 %v46, 4294901760
    %v1259 = vsub.f32 %v46, %v1258
    %1260 = vmatprep.mubr.f32.mxu0 %v1259
    %v1261 = vand.u32 %v45, 4294901760
    %v1262 = vsub.f32 %v45, %v1261
    %1263 = vmatmul.mubr.f32.gmra.mrb[0].mxu0 %v1262
    %v1264 = vpop.f32.mrb[0].mxu0
    %v1265 = vadd.f32 %v1159, %v1264
    %v1266 = vpop.f32.mrb[0].mxu0
    %1267 = vdwg.mxu0
    %1268 = vmatprep.subr.mxu0 0.0
    %1269 = vmatpush1.msra.mxu0 %v180
    %1270 = vmatprep.subr.mxu0 0.0
    %1271 = vmatpush1.msra.mxu0 %v181
    %1272 = vmatprep.subr.mxu0 0.0
    %1273 = vmatpush1.msra.mxu0 %v182
    %1274 = vmatprep.subr.mxu0 0.0
    %1275 = vmatpush1.msra.mxu0 %v183
    %1276 = vmatprep.subr.mxu0 0.0
    %1277 = vmatpush1.msra.mxu0 %v184
    %1278 = vmatprep.subr.mxu0 0.0
    %1279 = vmatpush1.msra.mxu0 %v185
    %1280 = vmatprep.subr.mxu0 0.0
    %1281 = vmatpush1.msra.mxu0 %v186
    %1282 = vmatprep.subr.mxu0 0.0
    %1283 = vmatpush1.msra.mxu0 %v187
    %1284 = vmatprep.subr.mxu0 0.0
    %1285 = vmatpush1.msra.mxu0 %v188
    %1286 = vmatprep.subr.mxu0 0.0
    %1287 = vmatpush1.msra.mxu0 %v189
    %1288 = vmatprep.subr.mxu0 0.0
    %1289 = vmatpush1.msra.mxu0 %v190
    %1290 = vmatprep.subr.mxu0 0.0
    %1291 = vmatpush1.msra.mxu0 %v191
    %1292 = vmatprep.subr.mxu0 0.0
    %1293 = vmatpush1.msra.mxu0 %v192
    %1294 = vmatprep.subr.mxu0 0.0
    %1295 = vmatpush1.msra.mxu0 %v193
    %1296 = vmatprep.subr.mxu0 0.0
    %1297 = vmatpush1.msra.mxu0 %v194
    %1298 = vmatprep.subr.mxu0 0.0
    %1299 = vmatpush1.msra.mxu0 %v195
    %1300 = vmatprep.subr.mxu0 0.0
    %1301 = vmatpush1.msra.mxu0 %v196
    %1302 = vmatprep.subr.mxu0 0.0
    %1303 = vmatpush1.msra.mxu0 %v197
    %1304 = vmatprep.subr.mxu0 0.0
    %1305 = vmatpush1.msra.mxu0 %v198
    %1306 = vmatprep.subr.mxu0 0.0
    %1307 = vmatpush1.msra.mxu0 %v199
    %1308 = vmatprep.subr.mxu0 0.0
    %1309 = vmatpush1.msra.mxu0 %v200
    %1310 = vmatprep.subr.mxu0 0.0
    %1311 = vmatpush1.msra.mxu0 %v201
    %1312 = vmatprep.subr.mxu0 0.0
    %1313 = vmatpush1.msra.mxu0 %v202
    %1314 = vmatprep.subr.mxu0 0.0
    %1315 = vmatpush1.msra.mxu0 %v203
    %1316 = vmatprep.subr.mxu0 0.0
    %1317 = vmatpush1.msra.mxu0 %v204
    %1318 = vmatprep.subr.mxu0 0.0
    %1319 = vmatpush1.msra.mxu0 %v205
    %1320 = vmatprep.subr.mxu0 0.0
    %1321 = vmatpush1.msra.mxu0 %v206
    %1322 = vmatprep.subr.mxu0 0.0
    %1323 = vmatpush1.msra.mxu0 %v207
    %1324 = vmatprep.subr.mxu0 0.0
    %1325 = vmatpush1.msra.mxu0 %v208
    %1326 = vmatprep.subr.mxu0 0.0
    %1327 = vmatpush1.msra.mxu0 %v209
    %1328 = vmatprep.subr.mxu0 0.0
    %1329 = vmatpush1.msra.mxu0 %v210
    %1330 = vmatprep.subr.mxu0 0.0
    %1331 = vmatpush1.msra.mxu0 %v211
    %v1332 = vand.u32 %v46, 4294901760
    %v1333 = vsub.f32 %v46, %v1332
    %v1334 = vand.u32 %v1333, 4294901760
    %1335 = vmatprep.mubr.f32.mxu0 %v1334
    %v1336 = vand.u32 %v45, 4294901760
    %v1337 = vsub.f32 %v45, %v1336
    %v1338 = vand.u32 %v1337, 4294901760
    %1339 = vmatmul.mubr.f32.gmra.mrb[0].mxu0 %v1338
    %v1340 = vpop.f32.mrb[0].mxu0
    %v1341 = vadd.f32 %v1265, %v1340
    %v1342 = vpop.f32.mrb[0].mxu0
    %1343 = vdwg.mxu0
    %1344 = vmatprep.subr.mxu0 0.0
    %v1345 = vsub.f32 %v180, %v180
    %v1346 = vand.u32 %v1345, 4294901760
    %1347 = vmatpush1.msra.mxu0 %v1346
    %1348 = vmatprep.subr.mxu0 0.0
    %v1349 = vsub.f32 %v181, %v181
    %v1350 = vand.u32 %v1349, 4294901760
    %1351 = vmatpush1.msra.mxu0 %v1350
    %1352 = vmatprep.subr.mxu0 0.0
    %v1353 = vsub.f32 %v182, %v182
    %v1354 = vand.u32 %v1353, 4294901760
    %1355 = vmatpush1.msra.mxu0 %v1354
    %1356 = vmatprep.subr.mxu0 0.0
    %v1357 = vsub.f32 %v183, %v183
    %v1358 = vand.u32 %v1357, 4294901760
    %1359 = vmatpush1.msra.mxu0 %v1358
    %1360 = vmatprep.subr.mxu0 0.0
    %v1361 = vsub.f32 %v184, %v184
    %v1362 = vand.u32 %v1361, 4294901760
    %1363 = vmatpush1.msra.mxu0 %v1362
    %1364 = vmatprep.subr.mxu0 0.0
    %v1365 = vsub.f32 %v185, %v185
    %v1366 = vand.u32 %v1365, 4294901760
    %1367 = vmatpush1.msra.mxu0 %v1366
    %1368 = vmatprep.subr.mxu0 0.0
    %v1369 = vsub.f32 %v186, %v186
    %v1370 = vand.u32 %v1369, 4294901760
    %1371 = vmatpush1.msra.mxu0 %v1370
    %1372 = vmatprep.subr.mxu0 0.0
    %v1373 = vsub.f32 %v187, %v187
    %v1374 = vand.u32 %v1373, 4294901760
    %1375 = vmatpush1.msra.mxu0 %v1374
    %1376 = vmatprep.subr.mxu0 0.0
    %v1377 = vsub.f32 %v188, %v188
    %v1378 = vand.u32 %v1377, 4294901760
    %1379 = vmatpush1.msra.mxu0 %v1378
    %1380 = vmatprep.subr.mxu0 0.0
    %v1381 = vsub.f32 %v189, %v189
    %v1382 = vand.u32 %v1381, 4294901760
    %1383 = vmatpush1.msra.mxu0 %v1382
    %1384 = vmatprep.subr.mxu0 0.0
    %v1385 = vsub.f32 %v190, %v190
    %v1386 = vand.u32 %v1385, 4294901760
    %1387 = vmatpush1.msra.mxu0 %v1386
    %1388 = vmatprep.subr.mxu0 0.0
    %v1389 = vsub.f32 %v191, %v191
    %v1390 = vand.u32 %v1389, 4294901760
    %1391 = vmatpush1.msra.mxu0 %v1390
    %1392 = vmatprep.subr.mxu0 0.0
    %v1393 = vsub.f32 %v192, %v192
    %v1394 = vand.u32 %v1393, 4294901760
    %1395 = vmatpush1.msra.mxu0 %v1394
    %1396 = vmatprep.subr.mxu0 0.0
    %v1397 = vsub.f32 %v193, %v193
    %v1398 = vand.u32 %v1397, 4294901760
    %1399 = vmatpush1.msra.mxu0 %v1398
    %1400 = vmatprep.subr.mxu0 0.0
    %v1401 = vsub.f32 %v194, %v194
    %v1402 = vand.u32 %v1401, 4294901760
    %1403 = vmatpush1.msra.mxu0 %v1402
    %1404 = vmatprep.subr.mxu0 0.0
    %v1405 = vsub.f32 %v195, %v195
    %v1406 = vand.u32 %v1405, 4294901760
    %1407 = vmatpush1.msra.mxu0 %v1406
    %1408 = vmatprep.subr.mxu0 0.0
    %v1409 = vsub.f32 %v196, %v196
    %v1410 = vand.u32 %v1409, 4294901760
    %1411 = vmatpush1.msra.mxu0 %v1410
    %1412 = vmatprep.subr.mxu0 0.0
    %v1413 = vsub.f32 %v197, %v197
    %v1414 = vand.u32 %v1413, 4294901760
    %1415 = vmatpush1.msra.mxu0 %v1414
    %1416 = vmatprep.subr.mxu0 0.0
    %v1417 = vsub.f32 %v198, %v198
    %v1418 = vand.u32 %v1417, 4294901760
    %1419 = vmatpush1.msra.mxu0 %v1418
    %1420 = vmatprep.subr.mxu0 0.0
    %v1421 = vsub.f32 %v199, %v199
    %v1422 = vand.u32 %v1421, 4294901760
    %1423 = vmatpush1.msra.mxu0 %v1422
    %1424 = vmatprep.subr.mxu0 0.0
    %v1425 = vsub.f32 %v200, %v200
    %v1426 = vand.u32 %v1425, 4294901760
    %1427 = vmatpush1.msra.mxu0 %v1426
    %1428 = vmatprep.subr.mxu0 0.0
    %v1429 = vsub.f32 %v201, %v201
    %v1430 = vand.u32 %v1429, 4294901760
    %1431 = vmatpush1.msra.mxu0 %v1430
    %1432 = vmatprep.subr.mxu0 0.0
    %v1433 = vsub.f32 %v202, %v202
    %v1434 = vand.u32 %v1433, 4294901760
    %1435 = vmatpush1.msra.mxu0 %v1434
    %1436 = vmatprep.subr.mxu0 0.0
    %v1437 = vsub.f32 %v203, %v203
    %v1438 = vand.u32 %v1437, 4294901760
    %1439 = vmatpush1.msra.mxu0 %v1438
    %1440 = vmatprep.subr.mxu0 0.0
    %v1441 = vsub.f32 %v204, %v204
    %v1442 = vand.u32 %v1441, 4294901760
    %1443 = vmatpush1.msra.mxu0 %v1442
    %1444 = vmatprep.subr.mxu0 0.0
    %v1445 = vsub.f32 %v205, %v205
    %v1446 = vand.u32 %v1445, 4294901760
    %1447 = vmatpush1.msra.mxu0 %v1446
    %1448 = vmatprep.subr.mxu0 0.0
    %v1449 = vsub.f32 %v206, %v206
    %v1450 = vand.u32 %v1449, 4294901760
    %1451 = vmatpush1.msra.mxu0 %v1450
    %1452 = vmatprep.subr.mxu0 0.0
    %v1453 = vsub.f32 %v207, %v207
    %v1454 = vand.u32 %v1453, 4294901760
    %1455 = vmatpush1.msra.mxu0 %v1454
    %1456 = vmatprep.subr.mxu0 0.0
    %v1457 = vsub.f32 %v208, %v208
    %v1458 = vand.u32 %v1457, 4294901760
    %1459 = vmatpush1.msra.mxu0 %v1458
    %1460 = vmatprep.subr.mxu0 0.0
    %v1461 = vsub.f32 %v209, %v209
    %v1462 = vand.u32 %v1461, 4294901760
    %1463 = vmatpush1.msra.mxu0 %v1462
    %1464 = vmatprep.subr.mxu0 0.0
    %v1465 = vsub.f32 %v210, %v210
    %v1466 = vand.u32 %v1465, 4294901760
    %1467 = vmatpush1.msra.mxu0 %v1466
    %1468 = vmatprep.subr.mxu0 0.0
    %v1469 = vsub.f32 %v211, %v211
    %v1470 = vand.u32 %v1469, 4294901760
    %1471 = vmatpush1.msra.mxu0 %v1470
    %v1472 = vand.u32 %v46, 4294901760
    %1473 = vmatprep.mubr.f32.mxu0 %v1472
    %v1474 = vand.u32 %v45, 4294901760
    %1475 = vmatmul.mubr.f32.gmra.mrb[0].mxu0 %v1474
    %v1476 = vpop.f32.mrb[0].mxu0
    %v1477 = vadd.f32 %v1341, %v1476
    %v1478 = vpop.f32.mrb[0].mxu0
    %1479 = vdwg.mxu0
    %1480 = vmatprep.subr.mxu0 0.0
    %1481 = vmatpush1.msra.mxu0 %v180
    %1482 = vmatprep.subr.mxu0 0.0
    %1483 = vmatpush1.msra.mxu0 %v181
    %1484 = vmatprep.subr.mxu0 0.0
    %1485 = vmatpush1.msra.mxu0 %v182
    %1486 = vmatprep.subr.mxu0 0.0
    %1487 = vmatpush1.msra.mxu0 %v183
    %1488 = vmatprep.subr.mxu0 0.0
    %1489 = vmatpush1.msra.mxu0 %v184
    %1490 = vmatprep.subr.mxu0 0.0
    %1491 = vmatpush1.msra.mxu0 %v185
    %1492 = vmatprep.subr.mxu0 0.0
    %1493 = vmatpush1.msra.mxu0 %v186
    %1494 = vmatprep.subr.mxu0 0.0
    %1495 = vmatpush1.msra.mxu0 %v187
    %1496 = vmatprep.subr.mxu0 0.0
    %1497 = vmatpush1.msra.mxu0 %v188
    %1498 = vmatprep.subr.mxu0 0.0
    %1499 = vmatpush1.msra.mxu0 %v189
    %1500 = vmatprep.subr.mxu0 0.0
    %1501 = vmatpush1.msra.mxu0 %v190
    %1502 = vmatprep.subr.mxu0 0.0
    %1503 = vmatpush1.msra.mxu0 %v191
    %1504 = vmatprep.subr.mxu0 0.0
    %1505 = vmatpush1.msra.mxu0 %v192
    %1506 = vmatprep.subr.mxu0 0.0
    %1507 = vmatpush1.msra.mxu0 %v193
    %1508 = vmatprep.subr.mxu0 0.0
    %1509 = vmatpush1.msra.mxu0 %v194
    %1510 = vmatprep.subr.mxu0 0.0
    %1511 = vmatpush1.msra.mxu0 %v195
    %1512 = vmatprep.subr.mxu0 0.0
    %1513 = vmatpush1.msra.mxu0 %v196
    %1514 = vmatprep.subr.mxu0 0.0
    %1515 = vmatpush1.msra.mxu0 %v197
    %1516 = vmatprep.subr.mxu0 0.0
    %1517 = vmatpush1.msra.mxu0 %v198
    %1518 = vmatprep.subr.mxu0 0.0
    %1519 = vmatpush1.msra.mxu0 %v199
    %1520 = vmatprep.subr.mxu0 0.0
    %1521 = vmatpush1.msra.mxu0 %v200
    %1522 = vmatprep.subr.mxu0 0.0
    %1523 = vmatpush1.msra.mxu0 %v201
    %1524 = vmatprep.subr.mxu0 0.0
    %1525 = vmatpush1.msra.mxu0 %v202
    %1526 = vmatprep.subr.mxu0 0.0
    %1527 = vmatpush1.msra.mxu0 %v203
    %1528 = vmatprep.subr.mxu0 0.0
    %1529 = vmatpush1.msra.mxu0 %v204
    %1530 = vmatprep.subr.mxu0 0.0
    %1531 = vmatpush1.msra.mxu0 %v205
    %1532 = vmatprep.subr.mxu0 0.0
    %1533 = vmatpush1.msra.mxu0 %v206
    %1534 = vmatprep.subr.mxu0 0.0
    %1535 = vmatpush1.msra.mxu0 %v207
    %1536 = vmatprep.subr.mxu0 0.0
    %1537 = vmatpush1.msra.mxu0 %v208
    %1538 = vmatprep.subr.mxu0 0.0
    %1539 = vmatpush1.msra.mxu0 %v209
    %1540 = vmatprep.subr.mxu0 0.0
    %1541 = vmatpush1.msra.mxu0 %v210
    %1542 = vmatprep.subr.mxu0 0.0
    %1543 = vmatpush1.msra.mxu0 %v211
    %v1544 = vand.u32 %v46, 4294901760
    %1545 = vmatprep.mubr.f32.mxu0 %v1544
    %v1546 = vand.u32 %v45, 4294901760
    %1547 = vmatmul.mubr.f32.gmra.mrb[0].mxu0 %v1546
    %v1548 = vpop.f32.mrb[0].mxu0
    %v1549 = vadd.f32 %v1477, %v1548
    %v1550 = vpop.f32.mrb[0].mxu0
    %1551 = vdwg.mxu0
    %v1552 = vld [vmem:[%s2] sm:$0x1]
    %v1553 = vmul.f32 %v1552, 1.442695
    %v1554 = vpow.pop %v1553
    %v1555 = vrcp.pop 3.0
    %v1556 = vmul.f32 %v1554, %v1555
    %v1557 = vtanh.pop %v1556
    %v1558 = vmul.f32 %v1557, 3.0
    %v1559 = vmax.f32 %v1558, 1.0
    %v1560 = vrcp.pop %v1559
    %v1562 = vlaneseq
    %v1563 = vshrl.u32 %v1562, 7
    %v1564 = vsub.s32 0, %v1563
    %v1565 = vrot.slane %v1560, %v1564
    %v1567 = vmul.f32 %v1549, %v1565
    %v1568 = vtanh.pop %v1567
    %v1570 = vlaneseq
    %v1571 = vshrl.u32 %v1570, 7
    %v1572 = vsub.s32 0, %v1571
    %v1573 = vrot.slane %v1558, %v1572
    %v1575 = vmul.f32 %v1568, %v1573
    %v1576 = vld [vmem:[#allocation5] sm:$0xff]
    %v1577 = vadd.f32 %v1576, %v879
    %v1578 = vmul.f32 %v1575, 1.442695
    %v1579 = vpow.pop %v1578
    %v1580 = vmul.f32 %v1577, %v1579
    %1581 = vst [vmem:[#allocation7] sm:$0xff] %v1580
    %v1582 = vmul.u32 %v81, 4
    %vm1583 = vcmp.ge.s32.totalorder %v48, %v1582
    %vm1584 = vcmp.ge.s32.totalorder %v49, %v1582
    %vm1585 = vcmp.ge.s32.totalorder %v50, %v1582
    %vm1586 = vcmp.ge.s32.totalorder %v51, %v1582
    %vm1587 = vcmp.ge.s32.totalorder %v52, %v1582
    %vm1588 = vcmp.ge.s32.totalorder %v53, %v1582
    %vm1589 = vcmp.ge.s32.totalorder %v54, %v1582
    %vm1590 = vcmp.ge.s32.totalorder %v55, %v1582
    %vm1591 = vcmp.ge.s32.totalorder %v56, %v1582
    %vm1592 = vcmp.ge.s32.totalorder %v57, %v1582
    %vm1593 = vcmp.ge.s32.totalorder %v58, %v1582
    %vm1594 = vcmp.ge.s32.totalorder %v59, %v1582
    %vm1595 = vcmp.ge.s32.totalorder %v60, %v1582
    %vm1596 = vcmp.ge.s32.totalorder %v61, %v1582
    %vm1597 = vcmp.ge.s32.totalorder %v62, %v1582
    %vm1598 = vcmp.ge.s32.totalorder %v63, %v1582
    %v1599 = vadd.s32 %v81, 1
    %v1600 = vmul.u32 %v1599, 4
    %vm1601 = vcmp.lt.s32.totalorder %v48, %v1600
    %vm1602 = vcmp.lt.s32.totalorder %v49, %v1600
    %vm1603 = vcmp.lt.s32.totalorder %v50, %v1600
    %vm1604 = vcmp.lt.s32.totalorder %v51, %v1600
    %vm1605 = vcmp.lt.s32.totalorder %v52, %v1600
    %vm1606 = vcmp.lt.s32.totalorder %v53, %v1600
    %vm1607 = vcmp.lt.s32.totalorder %v54, %v1600
    %vm1608 = vcmp.lt.s32.totalorder %v55, %v1600
    %vm1609 = vcmp.lt.s32.totalorder %v56, %v1600
    %vm1610 = vcmp.lt.s32.totalorder %v57, %v1600
    %vm1611 = vcmp.lt.s32.totalorder %v58, %v1600
    %vm1612 = vcmp.lt.s32.totalorder %v59, %v1600
    %vm1613 = vcmp.lt.s32.totalorder %v60, %v1600
    %vm1614 = vcmp.lt.s32.totalorder %v61, %v1600
    %vm1615 = vcmp.lt.s32.totalorder %v62, %v1600
    %vm1616 = vcmp.lt.s32.totalorder %v63, %v1600
    %vm1617 = vmand %vm1583, %vm1601
    %vm1618 = vmand %vm1584, %vm1602
    %vm1619 = vmand %vm1585, %vm1603
    %vm1620 = vmand %vm1586, %vm1604
    %vm1621 = vmand %vm1587, %vm1605
    %vm1622 = vmand %vm1588, %vm1606
    %vm1623 = vmand %vm1589, %vm1607
    %vm1624 = vmand %vm1590, %vm1608
    %vm1625 = vmand %vm1591, %vm1609
    %vm1626 = vmand %vm1592, %vm1610
    %vm1627 = vmand %vm1593, %vm1611
    %vm1628 = vmand %vm1594, %vm1612
    %vm1629 = vmand %vm1595, %vm1613
    %vm1630 = vmand %vm1596, %vm1614
    %vm1631 = vmand %vm1597, %vm1615
    %vm1632 = vmand %vm1598, %vm1616
    %v1633 = vsel %vm1617, 1.0, 0.0
    %v1634 = vsel %vm1618, 1.0, 0.0
    %v1635 = vsel %vm1619, 1.0, 0.0
    %v1636 = vsel %vm1620, 1.0, 0.0
    %v1637 = vsel %vm1621, 1.0, 0.0
    %v1638 = vsel %vm1622, 1.0, 0.0
    %v1639 = vsel %vm1623, 1.0, 0.0
    %v1640 = vsel %vm1624, 1.0, 0.0
    %v1641 = vsel %vm1625, 1.0, 0.0
    %v1642 = vsel %vm1626, 1.0, 0.0
    %v1643 = vsel %vm1627, 1.0, 0.0
    %v1644 = vsel %vm1628, 1.0, 0.0
    %v1645 = vsel %vm1629, 1.0, 0.0
    %v1646 = vsel %vm1630, 1.0, 0.0
    %v1647 = vsel %vm1631, 1.0, 0.0
    %v1648 = vsel %vm1632, 1.0, 0.0
    %1649 = vmatprep.subr.mxu0 0.0
    %1650 = vmatpush1.msra.mxu0 %v1633
    %1651 = vmatprep.subr.mxu0 0.0
    %1652 = vmatpush1.msra.mxu0 %v1634
    %1653 = vmatprep.subr.mxu0 0.0
    %1654 = vmatpush1.msra.mxu0 %v1635
    %1655 = vmatprep.subr.mxu0 0.0
    %1656 = vmatpush1.msra.mxu0 %v1636
    %1657 = vmatprep.subr.mxu0 0.0
    %1658 = vmatpush1.msra.mxu0 %v1637
    %1659 = vmatprep.subr.mxu0 0.0
    %1660 = vmatpush1.msra.mxu0 %v1638
    %1661 = vmatprep.subr.mxu0 0.0
    %1662 = vmatpush1.msra.mxu0 %v1639
    %1663 = vmatprep.subr.mxu0 0.0
    %1664 = vmatpush1.msra.mxu0 %v1640
    %1665 = vmatprep.subr.mxu0 0.0
    %1666 = vmatpush1.msra.mxu0 %v1641
    %1667 = vmatprep.subr.mxu0 0.0
    %1668 = vmatpush1.msra.mxu0 %v1642
    %1669 = vmatprep.subr.mxu0 0.0
    %1670 = vmatpush1.msra.mxu0 %v1643
    %1671 = vmatprep.subr.mxu0 0.0
    %1672 = vmatpush1.msra.mxu0 %v1644
    %1673 = vmatprep.subr.mxu0 0.0
    %1674 = vmatpush1.msra.mxu0 %v1645
    %1675 = vmatprep.subr.mxu0 0.0
    %1676 = vmatpush1.msra.mxu0 %v1646
    %1677 = vmatprep.subr.mxu0 0.0
    %1678 = vmatpush1.msra.mxu0 %v1647
    %1679 = vmatprep.subr.mxu0 0.0
    %1680 = vmatpush1.msra.mxu0 %v1648
    %1681 = vmatprep.subr.mxu0 0.0
    %1682 = vmatpush1.msra.mxu0 0.0
    %1683 = vmatprep.subr.mxu0 0.0
    %1684 = vmatpush1.msra.mxu0 0.0
    %1685 = vmatprep.subr.mxu0 0.0
    %1686 = vmatpush1.msra.mxu0 0.0
    %1687 = vmatprep.subr.mxu0 0.0
    %1688 = vmatpush1.msra.mxu0 0.0
    %1689 = vmatprep.subr.mxu0 0.0
    %1690 = vmatpush1.msra.mxu0 0.0
    %1691 = vmatprep.subr.mxu0 0.0
    %1692 = vmatpush1.msra.mxu0 0.0
    %1693 = vmatprep.subr.mxu0 0.0
    %1694 = vmatpush1.msra.mxu0 0.0
    %1695 = vmatprep.subr.mxu0 0.0
    %1696 = vmatpush1.msra.mxu0 0.0
    %1697 = vmatprep.subr.mxu0 0.0
    %1698 = vmatpush1.msra.mxu0 0.0
    %1699 = vmatprep.subr.mxu0 0.0
    %1700 = vmatpush1.msra.mxu0 0.0
    %1701 = vmatprep.subr.mxu0 0.0
    %1702 = vmatpush1.msra.mxu0 0.0
    %1703 = vmatprep.subr.mxu0 0.0
    %1704 = vmatpush1.msra.mxu0 0.0
    %1705 = vmatprep.subr.mxu0 0.0
    %1706 = vmatpush1.msra.mxu0 0.0
    %1707 = vmatprep.subr.mxu0 0.0
    %1708 = vmatpush1.msra.mxu0 0.0
    %1709 = vmatprep.subr.mxu0 0.0
    %1710 = vmatpush1.msra.mxu0 0.0
    %1711 = vmatprep.subr.mxu0 0.0
    %1712 = vmatpush1.msra.mxu0 0.0
    %1713 = vmatprep.mubr.f32.mxu0 0.0
    %v1714 = vand.u32 %v1575, 4294901760
    %v1715 = vsub.f32 %v1575, %v1714
    %v1716 = vand.u32 %v1715, 4294901760
    %v1717 = vsub.f32 %v1715, %v1716
    %v1718 = vand.u32 %v1717, 4294901760
    %1719 = vmatmul.mubr.f32.gmra.mrb[0].mxu0 %v1718
    %v1720 = vpop.f32.mrb[0].mxu0
    %v1721 = vadd.f32 0.0, %v1720
    %v1722 = vpop.f32.mrb[0].mxu0
    %1723 = vdwg.mxu0
    %1724 = vmatprep.subr.mxu0 0.0
    %v1725 = vsub.f32 %v1633, %v1633
    %v1726 = vand.u32 %v1725, 4294901760
    %v1727 = vsub.f32 %v1725, %v1726
    %v1728 = vand.u32 %v1727, 4294901760
    %1729 = vmatpush1.msra.mxu0 %v1728
    %1730 = vmatprep.subr.mxu0 0.0
    %v1731 = vsub.f32 %v1634, %v1634
    %v1732 = vand.u32 %v1731, 4294901760
    %v1733 = vsub.f32 %v1731, %v1732
    %v1734 = vand.u32 %v1733, 4294901760
    %1735 = vmatpush1.msra.mxu0 %v1734
    %1736 = vmatprep.subr.mxu0 0.0
    %v1737 = vsub.f32 %v1635, %v1635
    %v1738 = vand.u32 %v1737, 4294901760
    %v1739 = vsub.f32 %v1737, %v1738
    %v1740 = vand.u32 %v1739, 4294901760
    %1741 = vmatpush1.msra.mxu0 %v1740
    %1742 = vmatprep.subr.mxu0 0.0
    %v1743 = vsub.f32 %v1636, %v1636
    %v1744 = vand.u32 %v1743, 4294901760
    %v1745 = vsub.f32 %v1743, %v1744
    %v1746 = vand.u32 %v1745, 4294901760
    %1747 = vmatpush1.msra.mxu0 %v1746
    %1748 = vmatprep.subr.mxu0 0.0
    %v1749 = vsub.f32 %v1637, %v1637
    %v1750 = vand.u32 %v1749, 4294901760
    %v1751 = vsub.f32 %v1749, %v1750
    %v1752 = vand.u32 %v1751, 4294901760
    %1753 = vmatpush1.msra.mxu0 %v1752
    %1754 = vmatprep.subr.mxu0 0.0
    %v1755 = vsub.f32 %v1638, %v1638
    %v1756 = vand.u32 %v1755, 4294901760
    %v1757 = vsub.f32 %v1755, %v1756
    %v1758 = vand.u32 %v1757, 4294901760
    %1759 = vmatpush1.msra.mxu0 %v1758
    %1760 = vmatprep.subr.mxu0 0.0
    %v1761 = vsub.f32 %v1639, %v1639
    %v1762 = vand.u32 %v1761, 4294901760
    %v1763 = vsub.f32 %v1761, %v1762
    %v1764 = vand.u32 %v1763, 4294901760
    %1765 = vmatpush1.msra.mxu0 %v1764
    %1766 = vmatprep.subr.mxu0 0.0
    %v1767 = vsub.f32 %v1640, %v1640
    %v1768 = vand.u32 %v1767, 4294901760
    %v1769 = vsub.f32 %v1767, %v1768
    %v1770 = vand.u32 %v1769, 4294901760
    %1771 = vmatpush1.msra.mxu0 %v1770
    %1772 = vmatprep.subr.mxu0 0.0
    %v1773 = vsub.f32 %v1641, %v1641
    %v1774 = vand.u32 %v1773, 4294901760
    %v1775 = vsub.f32 %v1773, %v1774
    %v1776 = vand.u32 %v1775, 4294901760
    %1777 = vmatpush1.msra.mxu0 %v1776
    %1778 = vmatprep.subr.mxu0 0.0
    %v1779 = vsub.f32 %v1642, %v1642
    %v1780 = vand.u32 %v1779, 4294901760
    %v1781 = vsub.f32 %v1779, %v1780
    %v1782 = vand.u32 %v1781, 4294901760
    %1783 = vmatpush1.msra.mxu0 %v1782
    %1784 = vmatprep.subr.mxu0 0.0
    %v1785 = vsub.f32 %v1643, %v1643
    %v1786 = vand.u32 %v1785, 4294901760
    %v1787 = vsub.f32 %v1785, %v1786
    %v1788 = vand.u32 %v1787, 4294901760
    %1789 = vmatpush1.msra.mxu0 %v1788
    %1790 = vmatprep.subr.mxu0 0.0
    %v1791 = vsub.f32 %v1644, %v1644
    %v1792 = vand.u32 %v1791, 4294901760
    %v1793 = vsub.f32 %v1791, %v1792
    %v1794 = vand.u32 %v1793, 4294901760
    %1795 = vmatpush1.msra.mxu0 %v1794
    %1796 = vmatprep.subr.mxu0 0.0
    %v1797 = vsub.f32 %v1645, %v1645
    %v1798 = vand.u32 %v1797, 4294901760
    %v1799 = vsub.f32 %v1797, %v1798
    %v1800 = vand.u32 %v1799, 4294901760
    %1801 = vmatpush1.msra.mxu0 %v1800
    %1802 = vmatprep.subr.mxu0 0.0
    %v1803 = vsub.f32 %v1646, %v1646
    %v1804 = vand.u32 %v1803, 4294901760
    %v1805 = vsub.f32 %v1803, %v1804
    %v1806 = vand.u32 %v1805, 4294901760
    %1807 = vmatpush1.msra.mxu0 %v1806
    %1808 = vmatprep.subr.mxu0 0.0
    %v1809 = vsub.f32 %v1647, %v1647
    %v1810 = vand.u32 %v1809, 4294901760
    %v1811 = vsub.f32 %v1809, %v1810
    %v1812 = vand.u32 %v1811, 4294901760
    %1813 = vmatpush1.msra.mxu0 %v1812
    %1814 = vmatprep.subr.mxu0 0.0
    %v1815 = vsub.f32 %v1648, %v1648
    %v1816 = vand.u32 %v1815, 4294901760
    %v1817 = vsub.f32 %v1815, %v1816
    %v1818 = vand.u32 %v1817, 4294901760
    %1819 = vmatpush1.msra.mxu0 %v1818
    %1820 = vmatprep.subr.mxu0 0.0
    %1821 = vmatpush1.msra.mxu0 0.0
    %1822 = vmatprep.subr.mxu0 0.0
    %1823 = vmatpush1.msra.mxu0 0.0
    %1824 = vmatprep.subr.mxu0 0.0
    %1825 = vmatpush1.msra.mxu0 0.0
    %1826 = vmatprep.subr.mxu0 0.0
    %1827 = vmatpush1.msra.mxu0 0.0
    %1828 = vmatprep.subr.mxu0 0.0
    %1829 = vmatpush1.msra.mxu0 0.0
    %1830 = vmatprep.subr.mxu0 0.0
    %1831 = vmatpush1.msra.mxu0 0.0
    %1832 = vmatprep.subr.mxu0 0.0
    %1833 = vmatpush1.msra.mxu0 0.0
    %1834 = vmatprep.subr.mxu0 0.0
    %1835 = vmatpush1.msra.mxu0 0.0
    %1836 = vmatprep.subr.mxu0 0.0
    %1837 = vmatpush1.msra.mxu0 0.0
    %1838 = vmatprep.subr.mxu0 0.0
    %1839 = vmatpush1.msra.mxu0 0.0
    %1840 = vmatprep.subr.mxu0 0.0
    %1841 = vmatpush1.msra.mxu0 0.0
    %1842 = vmatprep.subr.mxu0 0.0
    %1843 = vmatpush1.msra.mxu0 0.0
    %1844 = vmatprep.subr.mxu0 0.0
    %1845 = vmatpush1.msra.mxu0 0.0
    %1846 = vmatprep.subr.mxu0 0.0
    %1847 = vmatpush1.msra.mxu0 0.0
    %1848 = vmatprep.subr.mxu0 0.0
    %1849 = vmatpush1.msra.mxu0 0.0
    %1850 = vmatprep.subr.mxu0 0.0
    %1851 = vmatpush1.msra.mxu0 0.0
    %1852 = vmatprep.mubr.f32.mxu0 0.0
    %v1853 = vand.u32 %v1575, 4294901760
    %1854 = vmatmul.mubr.f32.gmra.mrb[0].mxu0 %v1853
    %v1855 = vpop.f32.mrb[0].mxu0
    %v1856 = vadd.f32 %v1721, %v1855
    %v1857 = vpop.f32.mrb[0].mxu0
    %1858 = vdwg.mxu0
    %1859 = vmatprep.subr.mxu0 0.0
    %v1860 = vsub.f32 %v1633, %v1633
    %1861 = vmatpush1.msra.mxu0 %v1860
    %1862 = vmatprep.subr.mxu0 0.0
    %v1863 = vsub.f32 %v1634, %v1634
    %1864 = vmatpush1.msra.mxu0 %v1863
    %1865 = vmatprep.subr.mxu0 0.0
    %v1866 = vsub.f32 %v1635, %v1635
    %1867 = vmatpush1.msra.mxu0 %v1866
    %1868 = vmatprep.subr.mxu0 0.0
    %v1869 = vsub.f32 %v1636, %v1636
    %1870 = vmatpush1.msra.mxu0 %v1869
    %1871 = vmatprep.subr.mxu0 0.0
    %v1872 = vsub.f32 %v1637, %v1637
    %1873 = vmatpush1.msra.mxu0 %v1872
    %1874 = vmatprep.subr.mxu0 0.0
    %v1875 = vsub.f32 %v1638, %v1638
    %1876 = vmatpush1.msra.mxu0 %v1875
    %1877 = vmatprep.subr.mxu0 0.0
    %v1878 = vsub.f32 %v1639, %v1639
    %1879 = vmatpush1.msra.mxu0 %v1878
    %1880 = vmatprep.subr.mxu0 0.0
    %v1881 = vsub.f32 %v1640, %v1640
    %1882 = vmatpush1.msra.mxu0 %v1881
    %1883 = vmatprep.subr.mxu0 0.0
    %v1884 = vsub.f32 %v1641, %v1641
    %1885 = vmatpush1.msra.mxu0 %v1884
    %1886 = vmatprep.subr.mxu0 0.0
    %v1887 = vsub.f32 %v1642, %v1642
    %1888 = vmatpush1.msra.mxu0 %v1887
    %1889 = vmatprep.subr.mxu0 0.0
    %v1890 = vsub.f32 %v1643, %v1643
    %1891 = vmatpush1.msra.mxu0 %v1890
    %1892 = vmatprep.subr.mxu0 0.0
    %v1893 = vsub.f32 %v1644, %v1644
    %1894 = vmatpush1.msra.mxu0 %v1893
    %1895 = vmatprep.subr.mxu0 0.0
    %v1896 = vsub.f32 %v1645, %v1645
    %1897 = vmatpush1.msra.mxu0 %v1896
    %1898 = vmatprep.subr.mxu0 0.0
    %v1899 = vsub.f32 %v1646, %v1646
    %1900 = vmatpush1.msra.mxu0 %v1899
    %1901 = vmatprep.subr.mxu0 0.0
    %v1902 = vsub.f32 %v1647, %v1647
    %1903 = vmatpush1.msra.mxu0 %v1902
    %1904 = vmatprep.subr.mxu0 0.0
    %v1905 = vsub.f32 %v1648, %v1648
    %1906 = vmatpush1.msra.mxu0 %v1905
    %1907 = vmatprep.subr.mxu0 0.0
    %1908 = vmatpush1.msra.mxu0 0.0
    %1909 = vmatprep.subr.mxu0 0.0
    %1910 = vmatpush1.msra.mxu0 0.0
    %1911 = vmatprep.subr.mxu0 0.0
    %1912 = vmatpush1.msra.mxu0 0.0
    %1913 = vmatprep.subr.mxu0 0.0
    %1914 = vmatpush1.msra.mxu0 0.0
    %1915 = vmatprep.subr.mxu0 0.0
    %1916 = vmatpush1.msra.mxu0 0.0
    %1917 = vmatprep.subr.mxu0 0.0
    %1918 = vmatpush1.msra.mxu0 0.0
    %1919 = vmatprep.subr.mxu0 0.0
    %1920 = vmatpush1.msra.mxu0 0.0
    %1921 = vmatprep.subr.mxu0 0.0
    %1922 = vmatpush1.msra.mxu0 0.0
    %1923 = vmatprep.subr.mxu0 0.0
    %1924 = vmatpush1.msra.mxu0 0.0
    %1925 = vmatprep.subr.mxu0 0.0
    %1926 = vmatpush1.msra.mxu0 0.0
    %1927 = vmatprep.subr.mxu0 0.0
    %1928 = vmatpush1.msra.mxu0 0.0
    %1929 = vmatprep.subr.mxu0 0.0
    %1930 = vmatpush1.msra.mxu0 0.0
    %1931 = vmatprep.subr.mxu0 0.0
    %1932 = vmatpush1.msra.mxu0 0.0
    %1933 = vmatprep.subr.mxu0 0.0
    %1934 = vmatpush1.msra.mxu0 0.0
    %1935 = vmatprep.subr.mxu0 0.0
    %1936 = vmatpush1.msra.mxu0 0.0
    %1937 = vmatprep.subr.mxu0 0.0
    %1938 = vmatpush1.msra.mxu0 0.0
    %1939 = vmatprep.mubr.f32.mxu0 0.0
    %v1940 = vand.u32 %v1575, 4294901760
    %v1941 = vsub.f32 %v1575, %v1940
    %1942 = vmatmul.mubr.f32.gmra.mrb[0].mxu0 %v1941
    %v1943 = vpop.f32.mrb[0].mxu0
    %v1944 = vadd.f32 %v1856, %v1943
    %v1945 = vpop.f32.mrb[0].mxu0
    %1946 = vdwg.mxu0
    %1947 = vmatprep.subr.mxu0 0.0
    %1948 = vmatpush1.msra.mxu0 %v1633
    %1949 = vmatprep.subr.mxu0 0.0
    %1950 = vmatpush1.msra.mxu0 %v1634
    %1951 = vmatprep.subr.mxu0 0.0
    %1952 = vmatpush1.msra.mxu0 %v1635
    %1953 = vmatprep.subr.mxu0 0.0
    %1954 = vmatpush1.msra.mxu0 %v1636
    %1955 = vmatprep.subr.mxu0 0.0
    %1956 = vmatpush1.msra.mxu0 %v1637
    %1957 = vmatprep.subr.mxu0 0.0
    %1958 = vmatpush1.msra.mxu0 %v1638
    %1959 = vmatprep.subr.mxu0 0.0
    %1960 = vmatpush1.msra.mxu0 %v1639
    %1961 = vmatprep.subr.mxu0 0.0
    %1962 = vmatpush1.msra.mxu0 %v1640
    %1963 = vmatprep.subr.mxu0 0.0
    %1964 = vmatpush1.msra.mxu0 %v1641
    %1965 = vmatprep.subr.mxu0 0.0
    %1966 = vmatpush1.msra.mxu0 %v1642
    %1967 = vmatprep.subr.mxu0 0.0
    %1968 = vmatpush1.msra.mxu0 %v1643
    %1969 = vmatprep.subr.mxu0 0.0
    %1970 = vmatpush1.msra.mxu0 %v1644
    %1971 = vmatprep.subr.mxu0 0.0
    %1972 = vmatpush1.msra.mxu0 %v1645
    %1973 = vmatprep.subr.mxu0 0.0
    %1974 = vmatpush1.msra.mxu0 %v1646
    %1975 = vmatprep.subr.mxu0 0.0
    %1976 = vmatpush1.msra.mxu0 %v1647
    %1977 = vmatprep.subr.mxu0 0.0
    %1978 = vmatpush1.msra.mxu0 %v1648
    %1979 = vmatprep.subr.mxu0 0.0
    %1980 = vmatpush1.msra.mxu0 0.0
    %1981 = vmatprep.subr.mxu0 0.0
    %1982 = vmatpush1.msra.mxu0 0.0
    %1983 = vmatprep.subr.mxu0 0.0
    %1984 = vmatpush1.msra.mxu0 0.0
    %1985 = vmatprep.subr.mxu0 0.0
    %1986 = vmatpush1.msra.mxu0 0.0
    %1987 = vmatprep.subr.mxu0 0.0
    %1988 = vmatpush1.msra.mxu0 0.0
    %1989 = vmatprep.subr.mxu0 0.0
    %1990 = vmatpush1.msra.mxu0 0.0
    %1991 = vmatprep.subr.mxu0 0.0
    %1992 = vmatpush1.msra.mxu0 0.0
    %1993 = vmatprep.subr.mxu0 0.0
    %1994 = vmatpush1.msra.mxu0 0.0
    %1995 = vmatprep.subr.mxu0 0.0
    %1996 = vmatpush1.msra.mxu0 0.0
    %1997 = vmatprep.subr.mxu0 0.0
    %1998 = vmatpush1.msra.mxu0 0.0
    %1999 = vmatprep.subr.mxu0 0.0
    %2000 = vmatpush1.msra.mxu0 0.0
    %2001 = vmatprep.subr.mxu0 0.0
    %2002 = vmatpush1.msra.mxu0 0.0
    %2003 = vmatprep.subr.mxu0 0.0
    %2004 = vmatpush1.msra.mxu0 0.0
    %2005 = vmatprep.subr.mxu0 0.0
    %2006 = vmatpush1.msra.mxu0 0.0
    %2007 = vmatprep.subr.mxu0 0.0
    %2008 = vmatpush1.msra.mxu0 0.0
    %2009 = vmatprep.subr.mxu0 0.0
    %2010 = vmatpush1.msra.mxu0 0.0
    %2011 = vmatprep.mubr.f32.mxu0 0.0
    %v2012 = vand.u32 %v1575, 4294901760
    %v2013 = vsub.f32 %v1575, %v2012
    %v2014 = vand.u32 %v2013, 4294901760
    %2015 = vmatmul.mubr.f32.gmra.mrb[0].mxu0 %v2014
    %v2016 = vpop.f32.mrb[0].mxu0
    %v2017 = vadd.f32 %v1944, %v2016
    %v2018 = vpop.f32.mrb[0].mxu0
    %2019 = vdwg.mxu0
    %2020 = vmatprep.subr.mxu0 0.0
    %v2021 = vsub.f32 %v1633, %v1633
    %v2022 = vand.u32 %v2021, 4294901760
    %2023 = vmatpush1.msra.mxu0 %v2022
    %2024 = vmatprep.subr.mxu0 0.0
    %v2025 = vsub.f32 %v1634, %v1634
    %v2026 = vand.u32 %v2025, 4294901760
    %2027 = vmatpush1.msra.mxu0 %v2026
    %2028 = vmatprep.subr.mxu0 0.0
    %v2029 = vsub.f32 %v1635, %v1635
    %v2030 = vand.u32 %v2029, 4294901760
    %2031 = vmatpush1.msra.mxu0 %v2030
    %2032 = vmatprep.subr.mxu0 0.0
    %v2033 = vsub.f32 %v1636, %v1636
    %v2034 = vand.u32 %v2033, 4294901760
    %2035 = vmatpush1.msra.mxu0 %v2034
    %2036 = vmatprep.subr.mxu0 0.0
    %v2037 = vsub.f32 %v1637, %v1637
    %v2038 = vand.u32 %v2037, 4294901760
    %2039 = vmatpush1.msra.mxu0 %v2038
    %2040 = vmatprep.subr.mxu0 0.0
    %v2041 = vsub.f32 %v1638, %v1638
    %v2042 = vand.u32 %v2041, 4294901760
    %2043 = vmatpush1.msra.mxu0 %v2042
    %2044 = vmatprep.subr.mxu0 0.0
    %v2045 = vsub.f32 %v1639, %v1639
    %v2046 = vand.u32 %v2045, 4294901760
    %2047 = vmatpush1.msra.mxu0 %v2046
    %2048 = vmatprep.subr.mxu0 0.0
    %v2049 = vsub.f32 %v1640, %v1640
    %v2050 = vand.u32 %v2049, 4294901760
    %2051 = vmatpush1.msra.mxu0 %v2050
    %2052 = vmatprep.subr.mxu0 0.0
    %v2053 = vsub.f32 %v1641, %v1641
    %v2054 = vand.u32 %v2053, 4294901760
    %2055 = vmatpush1.msra.mxu0 %v2054
    %2056 = vmatprep.subr.mxu0 0.0
    %v2057 = vsub.f32 %v1642, %v1642
    %v2058 = vand.u32 %v2057, 4294901760
    %2059 = vmatpush1.msra.mxu0 %v2058
    %2060 = vmatprep.subr.mxu0 0.0
    %v2061 = vsub.f32 %v1643, %v1643
    %v2062 = vand.u32 %v2061, 4294901760
    %2063 = vmatpush1.msra.mxu0 %v2062
    %2064 = vmatprep.subr.mxu0 0.0
    %v2065 = vsub.f32 %v1644, %v1644
    %v2066 = vand.u32 %v2065, 4294901760
    %2067 = vmatpush1.msra.mxu0 %v2066
    %2068 = vmatprep.subr.mxu0 0.0
    %v2069 = vsub.f32 %v1645, %v1645
    %v2070 = vand.u32 %v2069, 4294901760
    %2071 = vmatpush1.msra.mxu0 %v2070
    %2072 = vmatprep.subr.mxu0 0.0
    %v2073 = vsub.f32 %v1646, %v1646
    %v2074 = vand.u32 %v2073, 4294901760
    %2075 = vmatpush1.msra.mxu0 %v2074
    %2076 = vmatprep.subr.mxu0 0.0
    %v2077 = vsub.f32 %v1647, %v1647
    %v2078 = vand.u32 %v2077, 4294901760
    %2079 = vmatpush1.msra.mxu0 %v2078
    %2080 = vmatprep.subr.mxu0 0.0
    %v2081 = vsub.f32 %v1648, %v1648
    %v2082 = vand.u32 %v2081, 4294901760
    %2083 = vmatpush1.msra.mxu0 %v2082
    %2084 = vmatprep.subr.mxu0 0.0
    %2085 = vmatpush1.msra.mxu0 0.0
    %2086 = vmatprep.subr.mxu0 0.0
    %2087 = vmatpush1.msra.mxu0 0.0
    %2088 = vmatprep.subr.mxu0 0.0
    %2089 = vmatpush1.msra.mxu0 0.0
    %2090 = vmatprep.subr.mxu0 0.0
    %2091 = vmatpush1.msra.mxu0 0.0
    %2092 = vmatprep.subr.mxu0 0.0
    %2093 = vmatpush1.msra.mxu0 0.0
    %2094 = vmatprep.subr.mxu0 0.0
    %2095 = vmatpush1.msra.mxu0 0.0
    %2096 = vmatprep.subr.mxu0 0.0
    %2097 = vmatpush1.msra.mxu0 0.0
    %2098 = vmatprep.subr.mxu0 0.0
    %2099 = vmatpush1.msra.mxu0 0.0
    %2100 = vmatprep.subr.mxu0 0.0
    %2101 = vmatpush1.msra.mxu0 0.0
    %2102 = vmatprep.subr.mxu0 0.0
    %2103 = vmatpush1.msra.mxu0 0.0
    %2104 = vmatprep.subr.mxu0 0.0
    %2105 = vmatpush1.msra.mxu0 0.0
    %2106 = vmatprep.subr.mxu0 0.0
    %2107 = vmatpush1.msra.mxu0 0.0
    %2108 = vmatprep.subr.mxu0 0.0
    %2109 = vmatpush1.msra.mxu0 0.0
    %2110 = vmatprep.subr.mxu0 0.0
    %2111 = vmatpush1.msra.mxu0 0.0
    %2112 = vmatprep.subr.mxu0 0.0
    %2113 = vmatpush1.msra.mxu0 0.0
    %2114 = vmatprep.subr.mxu0 0.0
    %2115 = vmatpush1.msra.mxu0 0.0
    %2116 = vmatprep.mubr.f32.mxu0 0.0
    %v2117 = vand.u32 %v1575, 4294901760
    %2118 = vmatmul.mubr.f32.gmra.mrb[0].mxu0 %v2117
    %v2119 = vpop.f32.mrb[0].mxu0
    %v2120 = vadd.f32 %v2017, %v2119
    %v2121 = vpop.f32.mrb[0].mxu0
    %2122 = vdwg.mxu0
    %2123 = vmatprep.subr.mxu0 0.0
    %2124 = vmatpush1.msra.mxu0 %v1633
    %2125 = vmatprep.subr.mxu0 0.0
    %2126 = vmatpush1.msra.mxu0 %v1634
    %2127 = vmatprep.subr.mxu0 0.0
    %2128 = vmatpush1.msra.mxu0 %v1635
    %2129 = vmatprep.subr.mxu0 0.0
    %2130 = vmatpush1.msra.mxu0 %v1636
    %2131 = vmatprep.subr.mxu0 0.0
    %2132 = vmatpush1.msra.mxu0 %v1637
    %2133 = vmatprep.subr.mxu0 0.0
    %2134 = vmatpush1.msra.mxu0 %v1638
    %2135 = vmatprep.subr.mxu0 0.0
    %2136 = vmatpush1.msra.mxu0 %v1639
    %2137 = vmatprep.subr.mxu0 0.0
    %2138 = vmatpush1.msra.mxu0 %v1640
    %2139 = vmatprep.subr.mxu0 0.0
    %2140 = vmatpush1.msra.mxu0 %v1641
    %2141 = vmatprep.subr.mxu0 0.0
    %2142 = vmatpush1.msra.mxu0 %v1642
    %2143 = vmatprep.subr.mxu0 0.0
    %2144 = vmatpush1.msra.mxu0 %v1643
    %2145 = vmatprep.subr.mxu0 0.0
    %2146 = vmatpush1.msra.mxu0 %v1644
    %2147 = vmatprep.subr.mxu0 0.0
    %2148 = vmatpush1.msra.mxu0 %v1645
    %2149 = vmatprep.subr.mxu0 0.0
    %2150 = vmatpush1.msra.mxu0 %v1646
    %2151 = vmatprep.subr.mxu0 0.0
    %2152 = vmatpush1.msra.mxu0 %v1647
    %2153 = vmatprep.subr.mxu0 0.0
    %2154 = vmatpush1.msra.mxu0 %v1648
    %2155 = vmatprep.subr.mxu0 0.0
    %2156 = vmatpush1.msra.mxu0 0.0
    %2157 = vmatprep.subr.mxu0 0.0
    %2158 = vmatpush1.msra.mxu0 0.0
    %2159 = vmatprep.subr.mxu0 0.0
    %2160 = vmatpush1.msra.mxu0 0.0
    %2161 = vmatprep.subr.mxu0 0.0
    %2162 = vmatpush1.msra.mxu0 0.0
    %2163 = vmatprep.subr.mxu0 0.0
    %2164 = vmatpush1.msra.mxu0 0.0
    %2165 = vmatprep.subr.mxu0 0.0
    %2166 = vmatpush1.msra.mxu0 0.0
    %2167 = vmatprep.subr.mxu0 0.0
    %2168 = vmatpush1.msra.mxu0 0.0
    %2169 = vmatprep.subr.mxu0 0.0
    %2170 = vmatpush1.msra.mxu0 0.0
    %2171 = vmatprep.subr.mxu0 0.0
    %2172 = vmatpush1.msra.mxu0 0.0
    %2173 = vmatprep.subr.mxu0 0.0
    %2174 = vmatpush1.msra.mxu0 0.0
    %2175 = vmatprep.subr.mxu0 0.0
    %2176 = vmatpush1.msra.mxu0 0.0
    %2177 = vmatprep.subr.mxu0 0.0
    %2178 = vmatpush1.msra.mxu0 0.0
    %2179 = vmatprep.subr.mxu0 0.0
    %2180 = vmatpush1.msra.mxu0 0.0
    %2181 = vmatprep.subr.mxu0 0.0
    %2182 = vmatpush1.msra.mxu0 0.0
    %2183 = vmatprep.subr.mxu0 0.0
    %2184 = vmatpush1.msra.mxu0 0.0
    %2185 = vmatprep.subr.mxu0 0.0
    %2186 = vmatpush1.msra.mxu0 0.0
    %2187 = vmatprep.mubr.f32.mxu0 0.0
    %v2188 = vand.u32 %v1575, 4294901760
    %2189 = vmatmul.mubr.f32.gmra.mrb[0].mxu0 %v2188
    %v2190 = vpop.f32.mrb[0].mxu0
    %v2191 = vadd.f32 %v2120, %v2190
    %v2192 = vpop.f32.mrb[0].mxu0
    %2193 = vdwg.mxu0
    %v2194 = vld [vmem:[%s3] sm:$0xff]
    %v2195 = vsub.f32 %v2194, %v2191
    %vm2196 = vcmask 261120
    %2197 = vst.msk [vmem:[#allocation8] sm:$0xff] %vm2196, %v2195
    // Predicated region
    $region26: #{tpu_custom_call.1} parent=1 // pred_check
      _
    $region27: #{tpu_custom_call.1} parent=1 // pred_check_branch
      %2199 = sbr.rel (0) target = $region29
    $region28: #{tpu_custom_call.1} parent=1 // pred_region
      %s2201 = ssub.s32 128, 128
      %2202 = vsyncadd [#allocation4], %s2201
      %s2204 = sshll.u32 [#allocation7], 4
      %s2205 = int_to_ptr.vmem [resolvable:$true] %s2204
      %2207 = dma.vmem_to_hbm [thread:$0]  %s2205, 128, %s4, [#allocation4]
    $region29: #{tpu_custom_call.1} parent=1 // pred_fallthru
      _
    // Predicated region
    $region30: #{tpu_custom_call.1} parent=1 // pred_check
      _
    $region31: #{tpu_custom_call.1} parent=1 // pred_check_branch
      %2209 = sbr.rel (0) target = $region33
    $region32: #{tpu_custom_call.1} parent=1 // pred_region
      %s2211 = ssub.s32 128, 128
      %2212 = vsyncadd [#allocation9], %s2211
      %s2214 = sshll.u32 [#allocation8], 4
      %s2215 = int_to_ptr.vmem [resolvable:$true] %s2214
      %2217 = dma.vmem_to_hbm [thread:$0]  %s2215, 128, %s5, [#allocation9]
    $region33: #{tpu_custom_call.1} parent=1 // pred_fallthru
      _
    // Predicated region
    $region34: #{tpu_custom_call.1} parent=1 // pred_check
      _
    $region35: #{tpu_custom_call.1} parent=1 // pred_check_branch
      %2219 = sbr.rel (0) target = $region37
    $region36: #{tpu_custom_call.1} parent=1 // pred_region
      %2220 = dma.done [#allocation4], 128
    $region37: #{tpu_custom_call.1} parent=1 // pred_fallthru
      _
    // Predicated region
    $region38: #{tpu_custom_call.1} parent=1 // pred_check
      _
    $region39: #{tpu_custom_call.1} parent=1 // pred_check_branch
      %2222 = sbr.rel (0) target = $region41
    $region40: #{tpu_custom_call.1} parent=1 // pred_region
      %2223 = dma.done [#allocation9], 128
    $region41: #{tpu_custom_call.1} parent=1 // pred_fallthru
      _
    %2224 = vsyncpa [#allocation3], 1
    %2225 = vsyncpa [#allocation6], 1
    %2226 = vsyncpa [#allocation4], 1
    %2227 = vsyncpa [#allocation9], 1

</llo_original>
